<compile_context>
chip_gen: v7x
topology: tpu7x:2x2x1
jax: 0.10.0
libtpu: 0.0.40
codegen_flags: <defaults>
</compile_context>

<pallas_src>
import itertools
import numpy as np
import jax
import jax.numpy as jnp
from jax.experimental import pallas as pl
from jax.experimental.pallas import tpu as pltpu


# ----------------------------- configuration -----------------------------
B          = 2
IN_DIM     = 32                       # C
OUT_DIM    = 64
KEY_DIM    = 16
NUM_HEADS  = 2
ATTN_RATIO = 2
STRIDE     = 2
RES        = 4                        # input resolution
RES_       = RES // STRIDE            # output resolution
N          = RES * RES                # 16 input tokens
N_         = RES_ * RES_              # 4 output tokens
D          = ATTN_RATIO * KEY_DIM     # 32  per-head value dim
DH         = D * NUM_HEADS            # 64  concat value dim
NH_KD      = KEY_DIM * NUM_HEADS      # 32
H_KV       = DH + NH_KD               # 96  kv projection width
SCALE      = KEY_DIM ** (-0.5)
BN         = B * N                    # 32
BN_        = B * N_                   # 8


# ------------------------------ Pallas kernel -----------------------------
def attention_subsample_kernel(x_ref, sub_ref, wq_ref, bq_ref, wk_ref,
                               wv_ref, bv_ref, abm_ref, wp_ref, bp_ref, o_ref):
    # x_ref:   (B*N, C)        flattened tokens
    # sub_ref: (B*N_, B*N)     one-hot (block-diag) subsample matrix
    # wq/wk:   (NH, C, KD)     wv: (NH, C, D)     bq: (NH,1,KD)  bv: (NH,1,D)
    # abm_ref: (NH, B*N_, B*N) rel-pos bias on block diagonal, -1e9 off-diagonal
    # wp_ref:  (NH, D, OUT)    bp_ref: (1, OUT)
    xf = x_ref[...]                                                        # (BN, C)
    # Subsample as a one-hot matmul (exact row selection, MXU-friendly), shared by heads.
    xs = jnp.dot(sub_ref[...], xf, preferred_element_type=jnp.float32)    # (BN_, C)

    acc = jnp.zeros((BN_, OUT_DIM), jnp.float32)
    for h in range(NUM_HEADS):                      # static unroll, NUM_HEADS=2
        # q is pre-scaled by key_dim**-0.5 (folded into wq/bq host-side).
        q = jnp.dot(xs, wq_ref[h], preferred_element_type=jnp.float32) + bq_ref[h]
        # k bias omitted: its score contribution q_i . b_k is constant along the
        # softmax axis -> softmax-invariant, so it is exactly redundant.
        k = jnp.dot(xf, wk_ref[h], preferred_element_type=jnp.float32)
        v = jnp.dot(xf, wv_ref[h], preferred_element_type=jnp.float32) + bv_ref[h]

        # scores over ALL (batch x token) keys; cross-batch entries are masked
        # to -1e9 inside abm so exp() kills them exactly.  No explicit k.T.
        scores = jax.lax.dot_general(
            q, k, (((1,), (1,)), ((), ())),
            preferred_element_type=jnp.float32) + abm_ref[h]               # (BN_, BN)

        m = jnp.max(scores, axis=-1, keepdims=True)
        e = jnp.exp(scores - m)
        p = e * pl.reciprocal(jnp.sum(e, axis=-1, keepdims=True), approx=True)

        o = jnp.dot(p, v, preferred_element_type=jnp.float32)              # (BN_, D)
        hs = o * jnp.clip(o + 3.0, 0.0, 6.0) * (1.0 / 6.0)                 # Hardswish
        # Head-concat folded into the proj matmul (per-head accumulate).
        acc = acc + jnp.dot(hs, wp_ref[h], preferred_element_type=jnp.float32)

    o_ref[...] = (acc + bp_ref[...]).astype(o_ref.dtype)


def attention_subsample(x, sub, wq, bq, wk, wv, bv, abm, wp, bp):
    xf = x.reshape(BN, IN_DIM)

    def full(shape):
        return pl.BlockSpec(shape, lambda i: (0,) * len(shape))

    out = pl.pallas_call(
        attention_subsample_kernel,
        out_shape=jax.ShapeDtypeStruct((BN_, OUT_DIM), jnp.float32),
        grid=(1,),
        in_specs=[
            full((BN, IN_DIM)),
            full((BN_, BN)),
            full((NUM_HEADS, IN_DIM, KEY_DIM)),
            full((NUM_HEADS, 1, KEY_DIM)),
            full((NUM_HEADS, IN_DIM, KEY_DIM)),
            full((NUM_HEADS, IN_DIM, D)),
            full((NUM_HEADS, 1, D)),
            full((NUM_HEADS, BN_, BN)),
            full((NUM_HEADS, D, OUT_DIM)),
            full((1, OUT_DIM)),
        ],
        out_specs=full((BN_, OUT_DIM)),
        compiler_params=pltpu.CompilerParams(
            dimension_semantics=("arbitrary",)),
    )(xf, sub, wq, bq, wk, wv, bv, abm, wp, bp)
    return out.reshape(B, N_, OUT_DIM)


# --------------------------- parameter construction ------------------------
def fuse_linear_bn(w, gamma, beta, running_mean, running_var, eps=1e-5):
    """Linear(no bias) + BatchNorm1d (eval) fused -> W_eff (in,out), b_eff (out,)."""
    s = gamma / jnp.sqrt(running_var + eps)
    w_eff = w * s[:, None]              # (out, in)
    b_eff = beta - running_mean * s     # (out,)
    return w_eff.T, b_eff


def build_params(key):
    ks = jax.random.split(key, 15)

    def linear_bn(kw, kg, kb, km, kvv, in_f, out_f):
        w  = 0.05 * jax.random.normal(kw, (out_f, in_f), jnp.float32)
        g  = 1.0 + 0.1 * jax.random.normal(kg, (out_f,), jnp.float32)
        be = 0.1 * jax.random.normal(kb, (out_f,), jnp.float32)
        rm = 0.1 * jax.random.normal(km, (out_f,), jnp.float32)
        rv = jax.random.uniform(kvv, (out_f,), jnp.float32, 0.5, 1.5)
        return fuse_linear_bn(w, g, be, rm, rv)

    kv_p   = linear_bn(*ks[0:5],   IN_DIM, H_KV)    # (C, 96), (96,)
    q_p    = linear_bn(*ks[5:10],  IN_DIM, NH_KD)   # (C, 32), (32,)
    proj_p = linear_bn(*ks[10:15], DH, OUT_DIM)     # (64, OUT), (OUT,)
    return kv_p, q_p, proj_p


def split_heads_for_kernel(wkv_t, bkv, wq_t, bq, wp_t, bp):
    per = KEY_DIM + D
    wk = jnp.stack([wkv_t[:, h*per:h*per + KEY_DIM] for h in range(NUM_HEADS)])
    # NOTE: the k bias (bkv[..., :KEY_DIM] per head) is intentionally NOT passed to the
    # kernel: its contribution to attention scores is constant per query row and hence
    # softmax-invariant.
    wv = jnp.stack([wkv_t[:, h*per + KEY_DIM:(h+1)*per] for h in range(NUM_HEADS)])
    bv = jnp.stack([bkv[h*per + KEY_DIM:(h+1)*per] for h in range(NUM_HEADS)])[:, None, :]
    # softmax scale folded into q weights/bias
    wq = SCALE * jnp.stack([wq_t[:, h*KEY_DIM:(h+1)*KEY_DIM] for h in range(NUM_HEADS)])
    bqh = SCALE * jnp.stack([bq[h*KEY_DIM:(h+1)*KEY_DIM] for h in range(NUM_HEADS)])[:, None, :]
    wp = jnp.stack([wp_t[h*D:(h+1)*D, :] for h in range(NUM_HEADS)])
    bph = bp[None, :]
    return wq, bqh, wk, wv, bv, wp, bph


def build_subsample_matrix():
    s = np.zeros((N_, N), np.float32)
    for qi in range(RES_):
        for qj in range(RES_):
            s[qi * RES_ + qj, (qi * STRIDE) * RES + (qj * STRIDE)] = 1.0
    return jnp.asarray(np.kron(np.eye(B, dtype=np.float32), s))   # (B*N_, B*N)


def build_attention_bias(key):
    # Exact LeViT AttentionSubsample bias construction.
    points  = list(itertools.product(range(RES), range(RES)))
    points_ = list(itertools.product(range(RES_), range(RES_)))
    attention_offsets = {}
    idxs = []
    for p1 in points_:
        for p2 in points:
            size = 1
            offset = (abs(p1[0] * STRIDE - p2[0] + (size - 1) / 2),
                      abs(p1[1] * STRIDE - p2[1] + (size - 1) / 2))
            if offset not in attention_offsets:
                attention_offsets[offset] = len(attention_offsets)
            idxs.append(attention_offsets[offset])
    idxs = np.array(idxs, dtype=np.int32).reshape(N_, N)
    biases = 0.1 * jax.random.normal(
        key, (NUM_HEADS, len(attention_offsets)), jnp.float32)
    return biases[:, idxs]                                         # (NH, N_, N)


def build_masked_bias(ab):
    # Block-diagonal bias + (-1e9) cross-batch mask -> (NH, B*N_, B*N).
    ab_np = np.asarray(ab, np.float32)
    eye_b = np.eye(B, dtype=np.float32)
    blockdiag = np.stack([np.kron(eye_b, ab_np[h]) for h in range(NUM_HEADS)])
    offmask = (1.0 - np.kron(eye_b, np.ones((N_, N), np.float32))) * (-1e9)
    return jnp.asarray(blockdiag + offmask[None], jnp.float32)


# ------------------------------- reference ---------------------------------
def ref_forward(x, wkv_t, bkv, wq_t, bq, ab, wp_t, bp):
    kv = x @ wkv_t + bkv                                           # (B, N, 96)
    kv = kv.reshape(B, N, NUM_HEADS, KEY_DIM + D)
    k = kv[..., :KEY_DIM].transpose(0, 2, 1, 3)                    # (B, NH, N, KD)
    v = kv[..., KEY_DIM:].transpose(0, 2, 1, 3)                    # (B, NH, N, D)
    xs = x.reshape(B, RES, RES, IN_DIM)[:, ::STRIDE, ::STRIDE].reshape(B, -1, IN_DIM)
    q = (xs @ wq_t + bq).reshape(B, N_, NUM_HEADS, KEY_DIM).transpose(0, 2, 1, 3)
    attn = jnp.einsum("bhqk,bhnk->bhqn", q, k) * SCALE + ab[None]
    attn = jax.nn.softmax(attn, axis=-1)
    o = jnp.einsum("bhqn,bhnd->bhqd", attn, v)
    o = o.transpose(0, 2, 1, 3).reshape(B, N_, DH)
    hs = o * jnp.clip(o + 3.0, 0.0, 6.0) / 6.0                     # Hardswish
    return hs @ wp_t + bp


# --------------------------------- main -------------------------------------
if __name__ == "__main__":
    key = jax.random.PRNGKey(0)
    k_x, k_p, k_ab = jax.random.split(key, 3)

    x = jax.random.normal(k_x, (B, N, IN_DIM), jnp.float32)
    (wkv_t, bkv), (wq_t, bq), (wp_t, bp) = build_params(k_p)
    ab = build_attention_bias(k_ab)

    wq_h, bq_h, wk_h, wv_h, bv_h, wp_h, bp_h = split_heads_for_kernel(
        wkv_t, bkv, wq_t, bq, wp_t, bp)
    abm = build_masked_bias(ab)
    sub = build_subsample_matrix()

    out = attention_subsample(x, sub, wq_h, bq_h, wk_h,
                              wv_h, bv_h, abm, wp_h, bp_h)
    out = jax.block_until_ready(out)

    ref = ref_forward(x, wkv_t, bkv, wq_t, bq, ab, wp_t, bp)
    # tolerance relaxed slightly for the approximate (EUP) softmax reciprocal
    np.testing.assert_allclose(np.asarray(out), np.asarray(ref),
                               rtol=2e-3, atol=2e-3)
    print("KERNEL_OK")
</pallas_src>

<mosaic_0001>
module attributes {stable_mosaic.version = 11 : i64} {
  func.func @attention_subsample_kernel(%arg0: i32, %arg1: memref<32x32xf32, #tpu.memory_space<vmem>>, %arg2: memref<8x32xf32, #tpu.memory_space<vmem>>, %arg3: memref<2x32x16xf32, #tpu.memory_space<vmem>>, %arg4: memref<2x1x16xf32, #tpu.memory_space<vmem>>, %arg5: memref<2x32x16xf32, #tpu.memory_space<vmem>>, %arg6: memref<2x32x32xf32, #tpu.memory_space<vmem>>, %arg7: memref<2x1x32xf32, #tpu.memory_space<vmem>>, %arg8: memref<2x8x32xf32, #tpu.memory_space<vmem>>, %arg9: memref<2x32x64xf32, #tpu.memory_space<vmem>>, %arg10: memref<1x64xf32, #tpu.memory_space<vmem>>, %arg11: memref<8x64xf32, #tpu.memory_space<vmem>>) attributes {dimension_semantics = [#tpu.dimension_semantics<arbitrary>], iteration_bounds = array<i64: 1>, scalar_prefetch = 0 : i64, scratch_operands = 0 : i64, tpu.core_type = #tpu.core_type<tc>, window_params = [{pipeline_mode = #tpu.pipeline_mode<synchronous>, transform_indices = @transform_0, window_bounds = array<i64: 32, 32>}, {pipeline_mode = #tpu.pipeline_mode<synchronous>, transform_indices = @transform_1, window_bounds = array<i64: 8, 32>}, {pipeline_mode = #tpu.pipeline_mode<synchronous>, transform_indices = @transform_2, window_bounds = array<i64: 2, 32, 16>}, {pipeline_mode = #tpu.pipeline_mode<synchronous>, transform_indices = @transform_3, window_bounds = array<i64: 2, 1, 16>}, {pipeline_mode = #tpu.pipeline_mode<synchronous>, transform_indices = @transform_4, window_bounds = array<i64: 2, 32, 16>}, {pipeline_mode = #tpu.pipeline_mode<synchronous>, transform_indices = @transform_5, window_bounds = array<i64: 2, 32, 32>}, {pipeline_mode = #tpu.pipeline_mode<synchronous>, transform_indices = @transform_6, window_bounds = array<i64: 2, 1, 32>}, {pipeline_mode = #tpu.pipeline_mode<synchronous>, transform_indices = @transform_7, window_bounds = array<i64: 2, 8, 32>}, {pipeline_mode = #tpu.pipeline_mode<synchronous>, transform_indices = @transform_8, window_bounds = array<i64: 2, 32, 64>}, {pipeline_mode = #tpu.pipeline_mode<synchronous>, transform_indices = @transform_9, window_bounds = array<i64: 1, 64>}, {pipeline_mode = #tpu.pipeline_mode<synchronous>, transform_indices = @transform_10, window_bounds = array<i64: 8, 64>}]} {
    %c0 = arith.constant 0 : index
    %c0_0 = arith.constant 0 : index
    %0 = vector.load %arg1[%c0, %c0_0] : memref<32x32xf32, #tpu.memory_space<vmem>>, vector<32x32xf32>
    %c0_1 = arith.constant 0 : index
    %c0_2 = arith.constant 0 : index
    %1 = vector.load %arg2[%c0_1, %c0_2] : memref<8x32xf32, #tpu.memory_space<vmem>>, vector<8x32xf32>
    %cst = arith.constant dense<0.000000e+00> : vector<8x32xf32>
    %2 = tpu.matmul %1, %0, %cst {dimension_numbers = #tpu.dot_dimension_numbers<[1], [0], [0], [1], [0, 0, 1, 1], [], []>} : vector<8x32xf32>, vector<32x32xf32>, vector<8x32xf32> -> vector<8x32xf32>
    %cst_3 = arith.constant 0.000000e+00 : f32
    %3 = vector.broadcast %cst_3 : f32 to vector<8x64xf32>
    %c0_4 = arith.constant 0 : index
    %c0_5 = arith.constant 0 : index
    %c0_6 = arith.constant 0 : index
    %4 = vector.load %arg3[%c0_4, %c0_5, %c0_6] : memref<2x32x16xf32, #tpu.memory_space<vmem>>, vector<1x32x16xf32>
    %5 = vector.shape_cast %4 : vector<1x32x16xf32> to vector<32x16xf32>
    %cst_7 = arith.constant dense<0.000000e+00> : vector<8x16xf32>
    %6 = tpu.matmul %2, %5, %cst_7 {dimension_numbers = #tpu.dot_dimension_numbers<[1], [0], [0], [1], [0, 0, 1, 1], [], []>} : vector<8x32xf32>, vector<32x16xf32>, vector<8x16xf32> -> vector<8x16xf32>
    %c0_8 = arith.constant 0 : index
    %c0_9 = arith.constant 0 : index
    %c0_10 = arith.constant 0 : index
    %7 = vector.load %arg4[%c0_8, %c0_9, %c0_10] : memref<2x1x16xf32, #tpu.memory_space<vmem>>, vector<1x1x16xf32>
    %8 = vector.shape_cast %7 : vector<1x1x16xf32> to vector<1x16xf32>
    %9 = vector.broadcast %8 : vector<1x16xf32> to vector<8x16xf32>
    %10 = arith.addf %6, %9 : vector<8x16xf32>
    %c0_11 = arith.constant 0 : index
    %c0_12 = arith.constant 0 : index
    %c0_13 = arith.constant 0 : index
    %11 = vector.load %arg5[%c0_11, %c0_12, %c0_13] : memref<2x32x16xf32, #tpu.memory_space<vmem>>, vector<1x32x16xf32>
    %12 = vector.shape_cast %11 : vector<1x32x16xf32> to vector<32x16xf32>
    %cst_14 = arith.constant dense<0.000000e+00> : vector<32x16xf32>
    %13 = tpu.matmul %0, %12, %cst_14 {dimension_numbers = #tpu.dot_dimension_numbers<[1], [0], [0], [1], [0, 0, 1, 1], [], []>} : vector<32x32xf32>, vector<32x16xf32>, vector<32x16xf32> -> vector<32x16xf32>
    %c0_15 = arith.constant 0 : index
    %c0_16 = arith.constant 0 : index
    %c0_17 = arith.constant 0 : index
    %14 = vector.load %arg6[%c0_15, %c0_16, %c0_17] : memref<2x32x32xf32, #tpu.memory_space<vmem>>, vector<1x32x32xf32>
    %15 = vector.shape_cast %14 : vector<1x32x32xf32> to vector<32x32xf32>
    %cst_18 = arith.constant dense<0.000000e+00> : vector<32x32xf32>
    %16 = tpu.matmul %0, %15, %cst_18 {dimension_numbers = #tpu.dot_dimension_numbers<[1], [0], [0], [1], [0, 0, 1, 1], [], []>} : vector<32x32xf32>, vector<32x32xf32>, vector<32x32xf32> -> vector<32x32xf32>
    %c0_19 = arith.constant 0 : index
    %c0_20 = arith.constant 0 : index
    %c0_21 = arith.constant 0 : index
    %17 = vector.load %arg7[%c0_19, %c0_20, %c0_21] : memref<2x1x32xf32, #tpu.memory_space<vmem>>, vector<1x1x32xf32>
    %18 = vector.shape_cast %17 : vector<1x1x32xf32> to vector<1x32xf32>
    %19 = vector.broadcast %18 : vector<1x32xf32> to vector<32x32xf32>
    %20 = arith.addf %16, %19 : vector<32x32xf32>
    %cst_22 = arith.constant dense<0.000000e+00> : vector<8x32xf32>
    %21 = tpu.matmul %10, %13, %cst_22 {dimension_numbers = #tpu.dot_dimension_numbers<[1], [1], [0], [0], [0, 0, 1, 0], [], []>} : vector<8x16xf32>, vector<32x16xf32>, vector<8x32xf32> -> vector<8x32xf32>
    %c0_23 = arith.constant 0 : index
    %c0_24 = arith.constant 0 : index
    %c0_25 = arith.constant 0 : index
    %22 = vector.load %arg8[%c0_23, %c0_24, %c0_25] : memref<2x8x32xf32, #tpu.memory_space<vmem>>, vector<1x8x32xf32>
    %23 = vector.shape_cast %22 : vector<1x8x32xf32> to vector<8x32xf32>
    %24 = arith.addf %21, %23 : vector<8x32xf32>
    %cst_26 = arith.constant dense<0xFF800000> : vector<8xf32>
    %25 = vector.multi_reduction <maximumf>, %24, %cst_26 [1] : vector<8x32xf32> to vector<8xf32>
    %26 = vector.shape_cast %25 : vector<8xf32> to vector<8x1xf32>
    %27 = vector.broadcast %26 : vector<8x1xf32> to vector<8x32xf32>
    %28 = arith.subf %24, %27 : vector<8x32xf32>
    %29 = math.exp %28 : vector<8x32xf32>
    %cst_27 = arith.constant dense<0.000000e+00> : vector<8xf32>
    %30 = vector.multi_reduction <add>, %29, %cst_27 [1] : vector<8x32xf32> to vector<8xf32>
    %31 = vector.shape_cast %30 : vector<8xf32> to vector<8x1xf32>
    %32 = tpu.reciprocal %31 {approx = true} : vector<8x1xf32> -> vector<8x1xf32>
    %33 = vector.broadcast %32 : vector<8x1xf32> to vector<8x32xf32>
    %34 = arith.mulf %29, %33 : vector<8x32xf32>
    %cst_28 = arith.constant dense<0.000000e+00> : vector<8x32xf32>
    %35 = tpu.matmul %34, %20, %cst_28 {dimension_numbers = #tpu.dot_dimension_numbers<[1], [0], [0], [1], [0, 0, 1, 1], [], []>} : vector<8x32xf32>, vector<32x32xf32>, vector<8x32xf32> -> vector<8x32xf32>
    %cst_29 = arith.constant 3.000000e+00 : f32
    %36 = vector.broadcast %cst_29 : f32 to vector<8x32xf32>
    %37 = arith.addf %35, %36 : vector<8x32xf32>
    %cst_30 = arith.constant 0.000000e+00 : f32
    %cst_31 = arith.constant 6.000000e+00 : f32
    %38 = vector.broadcast %cst_30 : f32 to vector<8x32xf32>
    %39 = arith.maximumf %38, %37 : vector<8x32xf32>
    %40 = vector.broadcast %cst_31 : f32 to vector<8x32xf32>
    %41 = arith.minimumf %40, %39 : vector<8x32xf32>
    %42 = arith.mulf %35, %41 : vector<8x32xf32>
    %cst_32 = arith.constant 0.166666672 : f32
    %43 = vector.broadcast %cst_32 : f32 to vector<8x32xf32>
    %44 = arith.mulf %42, %43 : vector<8x32xf32>
    %c0_33 = arith.constant 0 : index
    %c0_34 = arith.constant 0 : index
    %c0_35 = arith.constant 0 : index
    %45 = vector.load %arg9[%c0_33, %c0_34, %c0_35] : memref<2x32x64xf32, #tpu.memory_space<vmem>>, vector<1x32x64xf32>
    %46 = vector.shape_cast %45 : vector<1x32x64xf32> to vector<32x64xf32>
    %cst_36 = arith.constant dense<0.000000e+00> : vector<8x64xf32>
    %47 = tpu.matmul %44, %46, %cst_36 {dimension_numbers = #tpu.dot_dimension_numbers<[1], [0], [0], [1], [0, 0, 1, 1], [], []>} : vector<8x32xf32>, vector<32x64xf32>, vector<8x64xf32> -> vector<8x64xf32>
    %48 = arith.addf %3, %47 : vector<8x64xf32>
    %c1 = arith.constant 1 : index
    %c0_37 = arith.constant 0 : index
    %c0_38 = arith.constant 0 : index
    %49 = vector.load %arg3[%c1, %c0_37, %c0_38] : memref<2x32x16xf32, #tpu.memory_space<vmem>>, vector<1x32x16xf32>
    %50 = vector.shape_cast %49 : vector<1x32x16xf32> to vector<32x16xf32>
    %cst_39 = arith.constant dense<0.000000e+00> : vector<8x16xf32>
    %51 = tpu.matmul %2, %50, %cst_39 {dimension_numbers = #tpu.dot_dimension_numbers<[1], [0], [0], [1], [0, 0, 1, 1], [], []>} : vector<8x32xf32>, vector<32x16xf32>, vector<8x16xf32> -> vector<8x16xf32>
    %c1_40 = arith.constant 1 : index
    %c0_41 = arith.constant 0 : index
    %c0_42 = arith.constant 0 : index
    %52 = vector.load %arg4[%c1_40, %c0_41, %c0_42] : memref<2x1x16xf32, #tpu.memory_space<vmem>>, vector<1x1x16xf32>
    %53 = vector.shape_cast %52 : vector<1x1x16xf32> to vector<1x16xf32>
    %54 = vector.broadcast %53 : vector<1x16xf32> to vector<8x16xf32>
    %55 = arith.addf %51, %54 : vector<8x16xf32>
    %c1_43 = arith.constant 1 : index
    %c0_44 = arith.constant 0 : index
    %c0_45 = arith.constant 0 : index
    %56 = vector.load %arg5[%c1_43, %c0_44, %c0_45] : memref<2x32x16xf32, #tpu.memory_space<vmem>>, vector<1x32x16xf32>
    %57 = vector.shape_cast %56 : vector<1x32x16xf32> to vector<32x16xf32>
    %cst_46 = arith.constant dense<0.000000e+00> : vector<32x16xf32>
    %58 = tpu.matmul %0, %57, %cst_46 {dimension_numbers = #tpu.dot_dimension_numbers<[1], [0], [0], [1], [0, 0, 1, 1], [], []>} : vector<32x32xf32>, vector<32x16xf32>, vector<32x16xf32> -> vector<32x16xf32>
    %c1_47 = arith.constant 1 : index
    %c0_48 = arith.constant 0 : index
    %c0_49 = arith.constant 0 : index
    %59 = vector.load %arg6[%c1_47, %c0_48, %c0_49] : memref<2x32x32xf32, #tpu.memory_space<vmem>>, vector<1x32x32xf32>
    %60 = vector.shape_cast %59 : vector<1x32x32xf32> to vector<32x32xf32>
    %cst_50 = arith.constant dense<0.000000e+00> : vector<32x32xf32>
    %61 = tpu.matmul %0, %60, %cst_50 {dimension_numbers = #tpu.dot_dimension_numbers<[1], [0], [0], [1], [0, 0, 1, 1], [], []>} : vector<32x32xf32>, vector<32x32xf32>, vector<32x32xf32> -> vector<32x32xf32>
    %c1_51 = arith.constant 1 : index
    %c0_52 = arith.constant 0 : index
    %c0_53 = arith.constant 0 : index
    %62 = vector.load %arg7[%c1_51, %c0_52, %c0_53] : memref<2x1x32xf32, #tpu.memory_space<vmem>>, vector<1x1x32xf32>
    %63 = vector.shape_cast %62 : vector<1x1x32xf32> to vector<1x32xf32>
    %64 = vector.broadcast %63 : vector<1x32xf32> to vector<32x32xf32>
    %65 = arith.addf %61, %64 : vector<32x32xf32>
    %cst_54 = arith.constant dense<0.000000e+00> : vector<8x32xf32>
    %66 = tpu.matmul %55, %58, %cst_54 {dimension_numbers = #tpu.dot_dimension_numbers<[1], [1], [0], [0], [0, 0, 1, 0], [], []>} : vector<8x16xf32>, vector<32x16xf32>, vector<8x32xf32> -> vector<8x32xf32>
    %c1_55 = arith.constant 1 : index
    %c0_56 = arith.constant 0 : index
    %c0_57 = arith.constant 0 : index
    %67 = vector.load %arg8[%c1_55, %c0_56, %c0_57] : memref<2x8x32xf32, #tpu.memory_space<vmem>>, vector<1x8x32xf32>
    %68 = vector.shape_cast %67 : vector<1x8x32xf32> to vector<8x32xf32>
    %69 = arith.addf %66, %68 : vector<8x32xf32>
    %cst_58 = arith.constant dense<0xFF800000> : vector<8xf32>
    %70 = vector.multi_reduction <maximumf>, %69, %cst_58 [1] : vector<8x32xf32> to vector<8xf32>
    %71 = vector.shape_cast %70 : vector<8xf32> to vector<8x1xf32>
    %72 = vector.broadcast %71 : vector<8x1xf32> to vector<8x32xf32>
    %73 = arith.subf %69, %72 : vector<8x32xf32>
    %74 = math.exp %73 : vector<8x32xf32>
    %cst_59 = arith.constant dense<0.000000e+00> : vector<8xf32>
    %75 = vector.multi_reduction <add>, %74, %cst_59 [1] : vector<8x32xf32> to vector<8xf32>
    %76 = vector.shape_cast %75 : vector<8xf32> to vector<8x1xf32>
    %77 = tpu.reciprocal %76 {approx = true} : vector<8x1xf32> -> vector<8x1xf32>
    %78 = vector.broadcast %77 : vector<8x1xf32> to vector<8x32xf32>
    %79 = arith.mulf %74, %78 : vector<8x32xf32>
    %cst_60 = arith.constant dense<0.000000e+00> : vector<8x32xf32>
    %80 = tpu.matmul %79, %65, %cst_60 {dimension_numbers = #tpu.dot_dimension_numbers<[1], [0], [0], [1], [0, 0, 1, 1], [], []>} : vector<8x32xf32>, vector<32x32xf32>, vector<8x32xf32> -> vector<8x32xf32>
    %cst_61 = arith.constant 3.000000e+00 : f32
    %81 = vector.broadcast %cst_61 : f32 to vector<8x32xf32>
    %82 = arith.addf %80, %81 : vector<8x32xf32>
    %cst_62 = arith.constant 0.000000e+00 : f32
    %cst_63 = arith.constant 6.000000e+00 : f32
    %83 = vector.broadcast %cst_62 : f32 to vector<8x32xf32>
    %84 = arith.maximumf %83, %82 : vector<8x32xf32>
    %85 = vector.broadcast %cst_63 : f32 to vector<8x32xf32>
    %86 = arith.minimumf %85, %84 : vector<8x32xf32>
    %87 = arith.mulf %80, %86 : vector<8x32xf32>
    %cst_64 = arith.constant 0.166666672 : f32
    %88 = vector.broadcast %cst_64 : f32 to vector<8x32xf32>
    %89 = arith.mulf %87, %88 : vector<8x32xf32>
    %c1_65 = arith.constant 1 : index
    %c0_66 = arith.constant 0 : index
    %c0_67 = arith.constant 0 : index
    %90 = vector.load %arg9[%c1_65, %c0_66, %c0_67] : memref<2x32x64xf32, #tpu.memory_space<vmem>>, vector<1x32x64xf32>
    %91 = vector.shape_cast %90 : vector<1x32x64xf32> to vector<32x64xf32>
    %cst_68 = arith.constant dense<0.000000e+00> : vector<8x64xf32>
    %92 = tpu.matmul %89, %91, %cst_68 {dimension_numbers = #tpu.dot_dimension_numbers<[1], [0], [0], [1], [0, 0, 1, 1], [], []>} : vector<8x32xf32>, vector<32x64xf32>, vector<8x64xf32> -> vector<8x64xf32>
    %93 = arith.addf %48, %92 : vector<8x64xf32>
    %c0_69 = arith.constant 0 : index
    %c0_70 = arith.constant 0 : index
    %94 = vector.load %arg10[%c0_69, %c0_70] : memref<1x64xf32, #tpu.memory_space<vmem>>, vector<1x64xf32>
    %95 = vector.broadcast %94 : vector<1x64xf32> to vector<8x64xf32>
    %96 = arith.addf %93, %95 : vector<8x64xf32>
    %c0_71 = arith.constant 0 : index
    %c0_72 = arith.constant 0 : index
    %97 = vector.load %arg11[%c0_71, %c0_72] : memref<8x64xf32, #tpu.memory_space<vmem>>, vector<8x64xf32>
    tpu.vector_store %arg11[%c0_71, %c0_72], %96 {strides = array<i32>} : memref<8x64xf32, #tpu.memory_space<vmem>>, vector<8x64xf32>,
    return
  }
  func.func @transform_0(%arg0: i32) -> (i32, i32) {
    %c0_i32 = arith.constant 0 : i32
    %c0_i32_0 = arith.constant 0 : i32
    %c0_i32_1 = arith.constant 0 : i32
    return %c0_i32, %c0_i32_0 : i32, i32
  }
  func.func @transform_1(%arg0: i32) -> (i32, i32) {
    %c0_i32 = arith.constant 0 : i32
    %c0_i32_0 = arith.constant 0 : i32
    %c0_i32_1 = arith.constant 0 : i32
    return %c0_i32, %c0_i32_0 : i32, i32
  }
  func.func @transform_2(%arg0: i32) -> (i32, i32, i32) {
    %c0_i32 = arith.constant 0 : i32
    %c0_i32_0 = arith.constant 0 : i32
    %c0_i32_1 = arith.constant 0 : i32
    %c0_i32_2 = arith.constant 0 : i32
    return %c0_i32, %c0_i32_0, %c0_i32_1 : i32, i32, i32
  }
  func.func @transform_3(%arg0: i32) -> (i32, i32, i32) {
    %c0_i32 = arith.constant 0 : i32
    %c0_i32_0 = arith.constant 0 : i32
    %c0_i32_1 = arith.constant 0 : i32
    %c0_i32_2 = arith.constant 0 : i32
    return %c0_i32, %c0_i32_0, %c0_i32_1 : i32, i32, i32
  }
  func.func @transform_4(%arg0: i32) -> (i32, i32, i32) {
    %c0_i32 = arith.constant 0 : i32
    %c0_i32_0 = arith.constant 0 : i32
    %c0_i32_1 = arith.constant 0 : i32
    %c0_i32_2 = arith.constant 0 : i32
    return %c0_i32, %c0_i32_0, %c0_i32_1 : i32, i32, i32
  }
  func.func @transform_5(%arg0: i32) -> (i32, i32, i32) {
    %c0_i32 = arith.constant 0 : i32
    %c0_i32_0 = arith.constant 0 : i32
    %c0_i32_1 = arith.constant 0 : i32
    %c0_i32_2 = arith.constant 0 : i32
    return %c0_i32, %c0_i32_0, %c0_i32_1 : i32, i32, i32
  }
  func.func @transform_6(%arg0: i32) -> (i32, i32, i32) {
    %c0_i32 = arith.constant 0 : i32
    %c0_i32_0 = arith.constant 0 : i32
    %c0_i32_1 = arith.constant 0 : i32
    %c0_i32_2 = arith.constant 0 : i32
    return %c0_i32, %c0_i32_0, %c0_i32_1 : i32, i32, i32
  }
  func.func @transform_7(%arg0: i32) -> (i32, i32, i32) {
    %c0_i32 = arith.constant 0 : i32
    %c0_i32_0 = arith.constant 0 : i32
    %c0_i32_1 = arith.constant 0 : i32
    %c0_i32_2 = arith.constant 0 : i32
    return %c0_i32, %c0_i32_0, %c0_i32_1 : i32, i32, i32
  }
  func.func @transform_8(%arg0: i32) -> (i32, i32, i32) {
    %c0_i32 = arith.constant 0 : i32
    %c0_i32_0 = arith.constant 0 : i32
    %c0_i32_1 = arith.constant 0 : i32
    %c0_i32_2 = arith.constant 0 : i32
    return %c0_i32, %c0_i32_0, %c0_i32_1 : i32, i32, i32
  }
  func.func @transform_9(%arg0: i32) -> (i32, i32) {
    %c0_i32 = arith.constant 0 : i32
    %c0_i32_0 = arith.constant 0 : i32
    %c0_i32_1 = arith.constant 0 : i32
    return %c0_i32, %c0_i32_0 : i32, i32
  }
  func.func @transform_10(%arg0: i32) -> (i32, i32) {
    %c0_i32 = arith.constant 0 : i32
    %c0_i32_0 = arith.constant 0 : i32
    %c0_i32_1 = arith.constant 0 : i32
    return %c0_i32, %c0_i32_0 : i32, i32
  }
}

</mosaic_0001>

<llo_original>
// kernel: tpu_custom_call.1
$region0: #{tpu_custom_call.1}
  #allocation0 [shape = 'u32[]', space=smem, size = 0x4, offset = 0x4, fixed_abs, tag = 'smem constant byte address 0x4 - core index']
  #allocation1 [shape = 'u32[144,128]{1,0:T(1,128)}', space=vmem, size = 0x12000, scoped, tag = 'internal scratch']
  %s0 = inlined_call_operand.vmem [shape: f32[32,32], index: 0, kind: input, shape index: {}]
  %s1 = inlined_call_operand.hbm [shape: f32[8,32], index: 1, kind: input, shape index: {}]
  %s2 = inlined_call_operand.vmem [shape: f32[2,32,16], index: 2, kind: input, shape index: {}]
  %s3 = inlined_call_operand.vmem [shape: f32[2,1,16], index: 3, kind: input, shape index: {}]
  %s4 = inlined_call_operand.vmem [shape: f32[2,32,16], index: 4, kind: input, shape index: {}]
  %s5 = inlined_call_operand.vmem [shape: f32[2,32,32], index: 5, kind: input, shape index: {}]
  %s6 = inlined_call_operand.vmem [shape: f32[2,1,32], index: 6, kind: input, shape index: {}]
  %s7 = inlined_call_operand.vmem [shape: f32[2,8,32], index: 7, kind: input, shape index: {}]
  %s8 = inlined_call_operand.vmem [shape: f32[2,32,64], index: 8, kind: input, shape index: {}]
  %s9 = inlined_call_operand.vmem [shape: f32[1,64], index: 9, kind: input, shape index: {}]
  %s10 = inlined_call_operand.hbm [shape: f32[8,64], index: 10, kind: output, shape index: {}]
  %s11 = sld [smem:[#allocation0]]
  $region54: #{tpu_custom_call.1} parent=0
    _
  %s13 = ssub.s32 1, %s11
  %s14 = scalar_select 0, %s13, %s11
  $region1: #{tpu_custom_call.1} parent=0
    #allocation2 [shape = 'u8[4096]{0}', space=vmem, size = 0x1000, scoped, tag = 'input window, operand 1, single buffered']
    #allocation3 [shape = 's32[1]{0}', space=sflag, size = 0x4, scoped, tag = 'scoped memory for tpu_custom_call.1']
    #allocation4 [shape = 's32[1]{0}', space=sflag, size = 0x4, scoped, tag = 'scoped memory for tpu_custom_call.1']
    #allocation5 [shape = 'u8[4096]{0}', space=vmem, size = 0x1000, scoped, tag = 'output window, operand 0, single buffered']
    %15 = vsyncpa [#allocation3], 0
    %16 = vsyncpa [#allocation4], 0
    // Predicated region
    $region2: #{tpu_custom_call.1} parent=1 // pred_check
      _
    $region3: #{tpu_custom_call.1} parent=1 // pred_check_branch
      %18 = sbr.rel (0) target = $region5
    $region4: #{tpu_custom_call.1} parent=1 // pred_region
      _
    $region5: #{tpu_custom_call.1} parent=1 // pred_fallthru
      _
    // Predicated region
    $region6: #{tpu_custom_call.1} parent=1 // pred_check
      _
    $region7: #{tpu_custom_call.1} parent=1 // pred_check_branch
      %20 = sbr.rel (0) target = $region9
    $region8: #{tpu_custom_call.1} parent=1 // pred_region
      %s22 = ssub.s32 128, 128
      %23 = vsyncadd [#allocation3], %s22
      %s25 = sshll.u32 [#allocation2], 4
      %s26 = int_to_ptr.vmem [resolvable:$true] %s25
      %28 = dma.hbm_to_vmem [thread:$0]  %s1, 128, %s26, [#allocation3]
    $region9: #{tpu_custom_call.1} parent=1 // pred_fallthru
      _
    // Predicated region
    $region10: #{tpu_custom_call.1} parent=1 // pred_check
      _
    $region11: #{tpu_custom_call.1} parent=1 // pred_check_branch
      %30 = sbr.rel (0) target = $region13
    $region12: #{tpu_custom_call.1} parent=1 // pred_region
      _
    $region13: #{tpu_custom_call.1} parent=1 // pred_fallthru
      _
    // Predicated region
    $region14: #{tpu_custom_call.1} parent=1 // pred_check
      _
    $region15: #{tpu_custom_call.1} parent=1 // pred_check_branch
      %32 = sbr.rel (0) target = $region17
    $region16: #{tpu_custom_call.1} parent=1 // pred_region
      _
    $region17: #{tpu_custom_call.1} parent=1 // pred_fallthru
      _
    // Predicated region
    $region18: #{tpu_custom_call.1} parent=1 // pred_check
      _
    $region19: #{tpu_custom_call.1} parent=1 // pred_check_branch
      %34 = sbr.rel (0) target = $region21
    $region20: #{tpu_custom_call.1} parent=1 // pred_region
      _
    $region21: #{tpu_custom_call.1} parent=1 // pred_fallthru
      _
    // Predicated region
    $region22: #{tpu_custom_call.1} parent=1 // pred_check
      _
    $region23: #{tpu_custom_call.1} parent=1 // pred_check_branch
      %36 = sbr.rel (0) target = $region25
    $region24: #{tpu_custom_call.1} parent=1 // pred_region
      _
    $region25: #{tpu_custom_call.1} parent=1 // pred_fallthru
      _
    // Predicated region
    $region26: #{tpu_custom_call.1} parent=1 // pred_check
      _
    $region27: #{tpu_custom_call.1} parent=1 // pred_check_branch
      %38 = sbr.rel (0) target = $region29
    $region28: #{tpu_custom_call.1} parent=1 // pred_region
      _
    $region29: #{tpu_custom_call.1} parent=1 // pred_fallthru
      _
    // Predicated region
    $region30: #{tpu_custom_call.1} parent=1 // pred_check
      _
    $region31: #{tpu_custom_call.1} parent=1 // pred_check_branch
      %40 = sbr.rel (0) target = $region33
    $region32: #{tpu_custom_call.1} parent=1 // pred_region
      _
    $region33: #{tpu_custom_call.1} parent=1 // pred_fallthru
      _
    // Predicated region
    $region34: #{tpu_custom_call.1} parent=1 // pred_check
      _
    $region35: #{tpu_custom_call.1} parent=1 // pred_check_branch
      %42 = sbr.rel (0) target = $region37
    $region36: #{tpu_custom_call.1} parent=1 // pred_region
      _
    $region37: #{tpu_custom_call.1} parent=1 // pred_fallthru
      _
    // Predicated region
    $region38: #{tpu_custom_call.1} parent=1 // pred_check
      _
    $region39: #{tpu_custom_call.1} parent=1 // pred_check_branch
      %44 = sbr.rel (0) target = $region41
    $region40: #{tpu_custom_call.1} parent=1 // pred_region
      _
    $region41: #{tpu_custom_call.1} parent=1 // pred_fallthru
      _
    // Predicated region
    $region42: #{tpu_custom_call.1} parent=1 // pred_check
      _
    $region43: #{tpu_custom_call.1} parent=1 // pred_check_branch
      %46 = sbr.rel (0) target = $region45
    $region44: #{tpu_custom_call.1} parent=1 // pred_region
      %47 = dma.done [#allocation3], 128
    $region45: #{tpu_custom_call.1} parent=1 // pred_fallthru
      _
    %v48 = vld [vmem:[%s0] sm:$0xff]
    %v49 = vld [vmem:[%s0 + $0x8] sm:$0xff]
    %v50 = vld [vmem:[%s0 + $0x10] sm:$0xff]
    %v51 = vld [vmem:[%s0 + $0x18] sm:$0xff]
    %v52 = vld [vmem:[#allocation2] sm:$0xff]
    %vm53 = vcmask 261120
    %v55 = vsel %vm53, %v52, 0
    %57 = vmatprep.subr.mxu0 0.0
    %58 = vmatpush1.msra.mxu0 %v48
    %59 = vmatprep.subr.mxu0 0.0
    %60 = vmatpush1.msra.mxu0 %v49
    %61 = vmatprep.subr.mxu0 0.0
    %62 = vmatpush1.msra.mxu0 %v50
    %63 = vmatprep.subr.mxu0 0.0
    %64 = vmatpush1.msra.mxu0 %v51
    %65 = vmatprep.subr.mxu0 0.0
    %66 = vmatpush1.msra.mxu0 0.0
    %67 = vmatprep.subr.mxu0 0.0
    %68 = vmatpush1.msra.mxu0 0.0
    %69 = vmatprep.subr.mxu0 0.0
    %70 = vmatpush1.msra.mxu0 0.0
    %71 = vmatprep.subr.mxu0 0.0
    %72 = vmatpush1.msra.mxu0 0.0
    %73 = vmatprep.subr.mxu0 0.0
    %74 = vmatpush1.msra.mxu0 0.0
    %75 = vmatprep.subr.mxu0 0.0
    %76 = vmatpush1.msra.mxu0 0.0
    %77 = vmatprep.subr.mxu0 0.0
    %78 = vmatpush1.msra.mxu0 0.0
    %79 = vmatprep.subr.mxu0 0.0
    %80 = vmatpush1.msra.mxu0 0.0
    %81 = vmatprep.subr.mxu0 0.0
    %82 = vmatpush1.msra.mxu0 0.0
    %83 = vmatprep.subr.mxu0 0.0
    %84 = vmatpush1.msra.mxu0 0.0
    %85 = vmatprep.subr.mxu0 0.0
    %86 = vmatpush1.msra.mxu0 0.0
    %87 = vmatprep.subr.mxu0 0.0
    %88 = vmatpush1.msra.mxu0 0.0
    %89 = vmatprep.subr.mxu0 0.0
    %90 = vmatpush1.msra.mxu0 0.0
    %91 = vmatprep.subr.mxu0 0.0
    %92 = vmatpush1.msra.mxu0 0.0
    %93 = vmatprep.subr.mxu0 0.0
    %94 = vmatpush1.msra.mxu0 0.0
    %95 = vmatprep.subr.mxu0 0.0
    %96 = vmatpush1.msra.mxu0 0.0
    %97 = vmatprep.subr.mxu0 0.0
    %98 = vmatpush1.msra.mxu0 0.0
    %99 = vmatprep.subr.mxu0 0.0
    %100 = vmatpush1.msra.mxu0 0.0
    %101 = vmatprep.subr.mxu0 0.0
    %102 = vmatpush1.msra.mxu0 0.0
    %103 = vmatprep.subr.mxu0 0.0
    %104 = vmatpush1.msra.mxu0 0.0
    %105 = vmatprep.subr.mxu0 0.0
    %106 = vmatpush1.msra.mxu0 0.0
    %107 = vmatprep.subr.mxu0 0.0
    %108 = vmatpush1.msra.mxu0 0.0
    %109 = vmatprep.subr.mxu0 0.0
    %110 = vmatpush1.msra.mxu0 0.0
    %111 = vmatprep.subr.mxu0 0.0
    %112 = vmatpush1.msra.mxu0 0.0
    %113 = vmatprep.subr.mxu0 0.0
    %114 = vmatpush1.msra.mxu0 0.0
    %115 = vmatprep.subr.mxu0 0.0
    %116 = vmatpush1.msra.mxu0 0.0
    %117 = vmatprep.subr.mxu0 0.0
    %118 = vmatpush1.msra.mxu0 0.0
    %119 = vmatprep.subr.mxu0 0.0
    %120 = vmatpush1.msra.mxu0 0.0
    %121 = vmatprep.mubr.f32.mxu0 0.0
    %122 = vmatmul.mubr.f32.gmra.mrb[0].mxu0 %v55
    %v123 = vpop.f32.mrb[0].mxu0
    %v124 = vadd.f32 0.0, %v123
    %v125 = vpop.f32.mrb[0].mxu0
    %126 = vdwg.mxu0
    %v127 = vld [vmem:[%s2] sm:$0xff]
    %v128 = vld [vmem:[%s2 + $0x8] sm:$0xff]
    %v129 = vld [vmem:[%s2 + $0x10] sm:$0xff]
    %v130 = vld [vmem:[%s2 + $0x18] sm:$0xff]
    %v131 = vld [vmem:[%s3] sm:$0x1]
    %v133 = vlaneseq
    %v134 = vshrl.u32 %v133, 7
    %v135 = vsub.s32 0, %v134
    %v136 = vrot.slane %v131, %v135
    %v139 = vsel %vm53, %v124, 0
    %141 = vmatprep.subr.mxu0 0.0
    %142 = vmatpush1.msra.mxu0 %v127
    %143 = vmatprep.subr.mxu0 0.0
    %144 = vmatpush1.msra.mxu0 %v128
    %145 = vmatprep.subr.mxu0 0.0
    %146 = vmatpush1.msra.mxu0 %v129
    %147 = vmatprep.subr.mxu0 0.0
    %148 = vmatpush1.msra.mxu0 %v130
    %149 = vmatprep.subr.mxu0 0.0
    %150 = vmatpush1.msra.mxu0 0.0
    %151 = vmatprep.subr.mxu0 0.0
    %152 = vmatpush1.msra.mxu0 0.0
    %153 = vmatprep.subr.mxu0 0.0
    %154 = vmatpush1.msra.mxu0 0.0
    %155 = vmatprep.subr.mxu0 0.0
    %156 = vmatpush1.msra.mxu0 0.0
    %157 = vmatprep.subr.mxu0 0.0
    %158 = vmatpush1.msra.mxu0 0.0
    %159 = vmatprep.subr.mxu0 0.0
    %160 = vmatpush1.msra.mxu0 0.0
    %161 = vmatprep.subr.mxu0 0.0
    %162 = vmatpush1.msra.mxu0 0.0
    %163 = vmatprep.subr.mxu0 0.0
    %164 = vmatpush1.msra.mxu0 0.0
    %165 = vmatprep.subr.mxu0 0.0
    %166 = vmatpush1.msra.mxu0 0.0
    %167 = vmatprep.subr.mxu0 0.0
    %168 = vmatpush1.msra.mxu0 0.0
    %169 = vmatprep.subr.mxu0 0.0
    %170 = vmatpush1.msra.mxu0 0.0
    %171 = vmatprep.subr.mxu0 0.0
    %172 = vmatpush1.msra.mxu0 0.0
    %173 = vmatprep.subr.mxu0 0.0
    %174 = vmatpush1.msra.mxu0 0.0
    %175 = vmatprep.subr.mxu0 0.0
    %176 = vmatpush1.msra.mxu0 0.0
    %177 = vmatprep.subr.mxu0 0.0
    %178 = vmatpush1.msra.mxu0 0.0
    %179 = vmatprep.subr.mxu0 0.0
    %180 = vmatpush1.msra.mxu0 0.0
    %181 = vmatprep.subr.mxu0 0.0
    %182 = vmatpush1.msra.mxu0 0.0
    %183 = vmatprep.subr.mxu0 0.0
    %184 = vmatpush1.msra.mxu0 0.0
    %185 = vmatprep.subr.mxu0 0.0
    %186 = vmatpush1.msra.mxu0 0.0
    %187 = vmatprep.subr.mxu0 0.0
    %188 = vmatpush1.msra.mxu0 0.0
    %189 = vmatprep.subr.mxu0 0.0
    %190 = vmatpush1.msra.mxu0 0.0
    %191 = vmatprep.subr.mxu0 0.0
    %192 = vmatpush1.msra.mxu0 0.0
    %193 = vmatprep.subr.mxu0 0.0
    %194 = vmatpush1.msra.mxu0 0.0
    %195 = vmatprep.subr.mxu0 0.0
    %196 = vmatpush1.msra.mxu0 0.0
    %197 = vmatprep.subr.mxu0 0.0
    %198 = vmatpush1.msra.mxu0 0.0
    %199 = vmatprep.subr.mxu0 0.0
    %200 = vmatpush1.msra.mxu0 0.0
    %201 = vmatprep.subr.mxu0 0.0
    %202 = vmatpush1.msra.mxu0 0.0
    %203 = vmatprep.subr.mxu0 0.0
    %204 = vmatpush1.msra.mxu0 0.0
    %205 = vmatprep.mubr.f32.mxu0 0.0
    %206 = vmatmul.mubr.f32.gmra.mrb[0].mxu0 %v139
    %v207 = vpop.f32.mrb[0].mxu0
    %v208 = vadd.f32 %v136, %v207
    %v209 = vpop.f32.mrb[0].mxu0
    %210 = vdwg.mxu0
    %v211 = vld [vmem:[%s4] sm:$0xff]
    %v212 = vld [vmem:[%s4 + $0x8] sm:$0xff]
    %v213 = vld [vmem:[%s4 + $0x10] sm:$0xff]
    %v214 = vld [vmem:[%s4 + $0x18] sm:$0xff]
    %v216 = vsel %vm53, %v48, 0
    %v219 = vsel %vm53, %v49, 0
    %v222 = vsel %vm53, %v50, 0
    %v225 = vsel %vm53, %v51, 0
    %227 = vmatprep.subr.mxu0 0.0
    %228 = vmatpush1.msra.mxu0 %v211
    %229 = vmatprep.subr.mxu0 0.0
    %230 = vmatpush1.msra.mxu0 %v212
    %231 = vmatprep.subr.mxu0 0.0
    %232 = vmatpush1.msra.mxu0 %v213
    %233 = vmatprep.subr.mxu0 0.0
    %234 = vmatpush1.msra.mxu0 %v214
    %235 = vmatprep.subr.mxu0 0.0
    %236 = vmatpush1.msra.mxu0 0.0
    %237 = vmatprep.subr.mxu0 0.0
    %238 = vmatpush1.msra.mxu0 0.0
    %239 = vmatprep.subr.mxu0 0.0
    %240 = vmatpush1.msra.mxu0 0.0
    %241 = vmatprep.subr.mxu0 0.0
    %242 = vmatpush1.msra.mxu0 0.0
    %243 = vmatprep.subr.mxu0 0.0
    %244 = vmatpush1.msra.mxu0 0.0
    %245 = vmatprep.subr.mxu0 0.0
    %246 = vmatpush1.msra.mxu0 0.0
    %247 = vmatprep.subr.mxu0 0.0
    %248 = vmatpush1.msra.mxu0 0.0
    %249 = vmatprep.subr.mxu0 0.0
    %250 = vmatpush1.msra.mxu0 0.0
    %251 = vmatprep.subr.mxu0 0.0
    %252 = vmatpush1.msra.mxu0 0.0
    %253 = vmatprep.subr.mxu0 0.0
    %254 = vmatpush1.msra.mxu0 0.0
    %255 = vmatprep.subr.mxu0 0.0
    %256 = vmatpush1.msra.mxu0 0.0
    %257 = vmatprep.subr.mxu0 0.0
    %258 = vmatpush1.msra.mxu0 0.0
    %259 = vmatprep.subr.mxu0 0.0
    %260 = vmatpush1.msra.mxu0 0.0
    %261 = vmatprep.subr.mxu0 0.0
    %262 = vmatpush1.msra.mxu0 0.0
    %263 = vmatprep.subr.mxu0 0.0
    %264 = vmatpush1.msra.mxu0 0.0
    %265 = vmatprep.subr.mxu0 0.0
    %266 = vmatpush1.msra.mxu0 0.0
    %267 = vmatprep.subr.mxu0 0.0
    %268 = vmatpush1.msra.mxu0 0.0
    %269 = vmatprep.subr.mxu0 0.0
    %270 = vmatpush1.msra.mxu0 0.0
    %271 = vmatprep.subr.mxu0 0.0
    %272 = vmatpush1.msra.mxu0 0.0
    %273 = vmatprep.subr.mxu0 0.0
    %274 = vmatpush1.msra.mxu0 0.0
    %275 = vmatprep.subr.mxu0 0.0
    %276 = vmatpush1.msra.mxu0 0.0
    %277 = vmatprep.subr.mxu0 0.0
    %278 = vmatpush1.msra.mxu0 0.0
    %279 = vmatprep.subr.mxu0 0.0
    %280 = vmatpush1.msra.mxu0 0.0
    %281 = vmatprep.subr.mxu0 0.0
    %282 = vmatpush1.msra.mxu0 0.0
    %283 = vmatprep.subr.mxu0 0.0
    %284 = vmatpush1.msra.mxu0 0.0
    %285 = vmatprep.subr.mxu0 0.0
    %286 = vmatpush1.msra.mxu0 0.0
    %287 = vmatprep.subr.mxu0 0.0
    %288 = vmatpush1.msra.mxu0 0.0
    %289 = vmatprep.subr.mxu0 0.0
    %290 = vmatpush1.msra.mxu0 0.0
    %291 = vmatprep.mubr.f32.mxu0 0.0
    %292 = vmatmul.mubr.f32.gmra.mrb[0].mxu0 %v216
    %v293 = vpop.f32.mrb[0].mxu0
    %v294 = vadd.f32 0.0, %v293
    %v295 = vpop.f32.mrb[0].mxu0
    %296 = vmatprep.mubr.f32.mxu0 0.0
    %297 = vmatmul.mubr.f32.gmra.mrb[0].mxu0 %v219
    %v298 = vpop.f32.mrb[0].mxu0
    %v299 = vadd.f32 0.0, %v298
    %v300 = vpop.f32.mrb[0].mxu0
    %301 = vmatprep.mubr.f32.mxu0 0.0
    %302 = vmatmul.mubr.f32.gmra.mrb[0].mxu0 %v222
    %v303 = vpop.f32.mrb[0].mxu0
    %v304 = vadd.f32 0.0, %v303
    %v305 = vpop.f32.mrb[0].mxu0
    %306 = vmatprep.mubr.f32.mxu0 0.0
    %307 = vmatmul.mubr.f32.gmra.mrb[0].mxu0 %v225
    %v308 = vpop.f32.mrb[0].mxu0
    %v309 = vadd.f32 0.0, %v308
    %v310 = vpop.f32.mrb[0].mxu0
    %311 = vdwg.mxu0
    %v312 = vld [vmem:[%s5] sm:$0xff]
    %v313 = vld [vmem:[%s5 + $0x8] sm:$0xff]
    %v314 = vld [vmem:[%s5 + $0x10] sm:$0xff]
    %v315 = vld [vmem:[%s5 + $0x18] sm:$0xff]
    %v316 = vld [vmem:[%s6] sm:$0x1]
    %v318 = vlaneseq
    %v319 = vshrl.u32 %v318, 7
    %v320 = vsub.s32 0, %v319
    %v321 = vrot.slane %v316, %v320
    %323 = vmatprep.subr.mxu0 0.0
    %324 = vmatpush1.msra.mxu0 %v312
    %325 = vmatprep.subr.mxu0 0.0
    %326 = vmatpush1.msra.mxu0 %v313
    %327 = vmatprep.subr.mxu0 0.0
    %328 = vmatpush1.msra.mxu0 %v314
    %329 = vmatprep.subr.mxu0 0.0
    %330 = vmatpush1.msra.mxu0 %v315
    %331 = vmatprep.subr.mxu0 0.0
    %332 = vmatpush1.msra.mxu0 0.0
    %333 = vmatprep.subr.mxu0 0.0
    %334 = vmatpush1.msra.mxu0 0.0
    %335 = vmatprep.subr.mxu0 0.0
    %336 = vmatpush1.msra.mxu0 0.0
    %337 = vmatprep.subr.mxu0 0.0
    %338 = vmatpush1.msra.mxu0 0.0
    %339 = vmatprep.subr.mxu0 0.0
    %340 = vmatpush1.msra.mxu0 0.0
    %341 = vmatprep.subr.mxu0 0.0
    %342 = vmatpush1.msra.mxu0 0.0
    %343 = vmatprep.subr.mxu0 0.0
    %344 = vmatpush1.msra.mxu0 0.0
    %345 = vmatprep.subr.mxu0 0.0
    %346 = vmatpush1.msra.mxu0 0.0
    %347 = vmatprep.subr.mxu0 0.0
    %348 = vmatpush1.msra.mxu0 0.0
    %349 = vmatprep.subr.mxu0 0.0
    %350 = vmatpush1.msra.mxu0 0.0
    %351 = vmatprep.subr.mxu0 0.0
    %352 = vmatpush1.msra.mxu0 0.0
    %353 = vmatprep.subr.mxu0 0.0
    %354 = vmatpush1.msra.mxu0 0.0
    %355 = vmatprep.subr.mxu0 0.0
    %356 = vmatpush1.msra.mxu0 0.0
    %357 = vmatprep.subr.mxu0 0.0
    %358 = vmatpush1.msra.mxu0 0.0
    %359 = vmatprep.subr.mxu0 0.0
    %360 = vmatpush1.msra.mxu0 0.0
    %361 = vmatprep.subr.mxu0 0.0
    %362 = vmatpush1.msra.mxu0 0.0
    %363 = vmatprep.subr.mxu0 0.0
    %364 = vmatpush1.msra.mxu0 0.0
    %365 = vmatprep.subr.mxu0 0.0
    %366 = vmatpush1.msra.mxu0 0.0
    %367 = vmatprep.subr.mxu0 0.0
    %368 = vmatpush1.msra.mxu0 0.0
    %369 = vmatprep.subr.mxu0 0.0
    %370 = vmatpush1.msra.mxu0 0.0
    %371 = vmatprep.subr.mxu0 0.0
    %372 = vmatpush1.msra.mxu0 0.0
    %373 = vmatprep.subr.mxu0 0.0
    %374 = vmatpush1.msra.mxu0 0.0
    %375 = vmatprep.subr.mxu0 0.0
    %376 = vmatpush1.msra.mxu0 0.0
    %377 = vmatprep.subr.mxu0 0.0
    %378 = vmatpush1.msra.mxu0 0.0
    %379 = vmatprep.subr.mxu0 0.0
    %380 = vmatpush1.msra.mxu0 0.0
    %381 = vmatprep.subr.mxu0 0.0
    %382 = vmatpush1.msra.mxu0 0.0
    %383 = vmatprep.subr.mxu0 0.0
    %384 = vmatpush1.msra.mxu0 0.0
    %385 = vmatprep.subr.mxu0 0.0
    %386 = vmatpush1.msra.mxu0 0.0
    %387 = vmatprep.mubr.f32.mxu0 0.0
    %388 = vmatmul.mubr.f32.gmra.mrb[0].mxu0 %v216
    %v389 = vpop.f32.mrb[0].mxu0
    %v390 = vadd.f32 %v321, %v389
    %v391 = vpop.f32.mrb[0].mxu0
    %392 = vmatprep.mubr.f32.mxu0 0.0
    %393 = vmatmul.mubr.f32.gmra.mrb[0].mxu0 %v219
    %v394 = vpop.f32.mrb[0].mxu0
    %v395 = vadd.f32 %v321, %v394
    %v396 = vpop.f32.mrb[0].mxu0
    %397 = vmatprep.mubr.f32.mxu0 0.0
    %398 = vmatmul.mubr.f32.gmra.mrb[0].mxu0 %v222
    %v399 = vpop.f32.mrb[0].mxu0
    %v400 = vadd.f32 %v321, %v399
    %v401 = vpop.f32.mrb[0].mxu0
    %402 = vmatprep.mubr.f32.mxu0 0.0
    %403 = vmatmul.mubr.f32.gmra.mrb[0].mxu0 %v225
    %v404 = vpop.f32.mrb[0].mxu0
    %v405 = vadd.f32 %v321, %v404
    %v406 = vpop.f32.mrb[0].mxu0
    %407 = vdwg.mxu0
    %v408 = vld [vmem:[%s7] sm:$0xff]
    %vm409 = vcmask 130048
    %v411 = vsel %vm409, %v208, 0
    %v414 = vsel %vm409, %v294, 0
    %v417 = vsel %vm409, %v299, 0
    %v420 = vsel %vm409, %v304, 0
    %v423 = vsel %vm409, %v309, 0
    %425 = vmatprep.subr.mxu0 0.0
    %426 = vmatpush1.xpose.msra.mxu0 %v414
    %427 = vmatprep.subr.mxu0 0.0
    %428 = vmatpush1.xpose.msra.mxu0 %v417
    %429 = vmatprep.subr.mxu0 0.0
    %430 = vmatpush1.xpose.msra.mxu0 %v420
    %431 = vmatprep.subr.mxu0 0.0
    %432 = vmatpush1.xpose.msra.mxu0 %v423
    %433 = vmatprep.subr.mxu0 0.0
    %434 = vmatpush1.xpose.msra.mxu0 0.0
    %435 = vmatprep.subr.mxu0 0.0
    %436 = vmatpush1.xpose.msra.mxu0 0.0
    %437 = vmatprep.subr.mxu0 0.0
    %438 = vmatpush1.xpose.msra.mxu0 0.0
    %439 = vmatprep.subr.mxu0 0.0
    %440 = vmatpush1.xpose.msra.mxu0 0.0
    %441 = vmatprep.subr.mxu0 0.0
    %442 = vmatpush1.xpose.msra.mxu0 0.0
    %443 = vmatprep.subr.mxu0 0.0
    %444 = vmatpush1.xpose.msra.mxu0 0.0
    %445 = vmatprep.subr.mxu0 0.0
    %446 = vmatpush1.xpose.msra.mxu0 0.0
    %447 = vmatprep.subr.mxu0 0.0
    %448 = vmatpush1.xpose.msra.mxu0 0.0
    %449 = vmatprep.subr.mxu0 0.0
    %450 = vmatpush1.xpose.msra.mxu0 0.0
    %451 = vmatprep.subr.mxu0 0.0
    %452 = vmatpush1.xpose.msra.mxu0 0.0
    %453 = vmatprep.subr.mxu0 0.0
    %454 = vmatpush1.xpose.msra.mxu0 0.0
    %455 = vmatprep.subr.mxu0 0.0
    %456 = vmatpush1.xpose.msra.mxu0 0.0
    %457 = vmatprep.subr.mxu0 0.0
    %458 = vmatpush1.xpose.msra.mxu0 0.0
    %459 = vmatprep.subr.mxu0 0.0
    %460 = vmatpush1.xpose.msra.mxu0 0.0
    %461 = vmatprep.subr.mxu0 0.0
    %462 = vmatpush1.xpose.msra.mxu0 0.0
    %463 = vmatprep.subr.mxu0 0.0
    %464 = vmatpush1.xpose.msra.mxu0 0.0
    %465 = vmatprep.subr.mxu0 0.0
    %466 = vmatpush1.xpose.msra.mxu0 0.0
    %467 = vmatprep.subr.mxu0 0.0
    %468 = vmatpush1.xpose.msra.mxu0 0.0
    %469 = vmatprep.subr.mxu0 0.0
    %470 = vmatpush1.xpose.msra.mxu0 0.0
    %471 = vmatprep.subr.mxu0 0.0
    %472 = vmatpush1.xpose.msra.mxu0 0.0
    %473 = vmatprep.subr.mxu0 0.0
    %474 = vmatpush1.xpose.msra.mxu0 0.0
    %475 = vmatprep.subr.mxu0 0.0
    %476 = vmatpush1.xpose.msra.mxu0 0.0
    %477 = vmatprep.subr.mxu0 0.0
    %478 = vmatpush1.xpose.msra.mxu0 0.0
    %479 = vmatprep.subr.mxu0 0.0
    %480 = vmatpush1.xpose.msra.mxu0 0.0
    %481 = vmatprep.subr.mxu0 0.0
    %482 = vmatpush1.xpose.msra.mxu0 0.0
    %483 = vmatprep.subr.mxu0 0.0
    %484 = vmatpush1.xpose.msra.mxu0 0.0
    %485 = vmatprep.subr.mxu0 0.0
    %486 = vmatpush1.xpose.msra.mxu0 0.0
    %487 = vmatprep.subr.mxu0 0.0
    %488 = vmatpush1.xpose.msra.mxu0 0.0
    %489 = vmatprep.mubr.f32.mxu0 0.0
    %490 = vmatmul.mubr.f32.gmra.mrb[0].mxu0 %v411
    %v491 = vpop.f32.mrb[0].mxu0
    %v492 = vadd.f32 %v408, %v491
    %v493 = vpop.f32.mrb[0].mxu0
    %494 = vdwg.mxu0
    %v495 = vsel %vm53, %v492, -inf
    %496 = vmax.xlane.f32.xlu0 %v495
    %v497 = vpop.xlane.xlu0 %496
    %v498 = vsub.f32 %v492, %v497
    %v499 = vmul.f32 %v498, 1.442695
    %v500 = vpow.pop %v499
    %v501 = vsel %vm53, %v500, 0.0
    %502 = vadd.xlane.f32.xlu0 %v501
    %v503 = vpop.xlane.xlu0 %502
    %v504 = vrcp.pop %v503
    %v505 = vmul.f32 %v500, %v504
    %v507 = vsel %vm53, %v505, 0
    %509 = vmatprep.subr.mxu0 0.0
    %510 = vmatpush1.msra.mxu0 %v390
    %511 = vmatprep.subr.mxu0 0.0
    %512 = vmatpush1.msra.mxu0 %v395
    %513 = vmatprep.subr.mxu0 0.0
    %514 = vmatpush1.msra.mxu0 %v400
    %515 = vmatprep.subr.mxu0 0.0
    %516 = vmatpush1.msra.mxu0 %v405
    %517 = vmatprep.subr.mxu0 0.0
    %518 = vmatpush1.msra.mxu0 0.0
    %519 = vmatprep.subr.mxu0 0.0
    %520 = vmatpush1.msra.mxu0 0.0
    %521 = vmatprep.subr.mxu0 0.0
    %522 = vmatpush1.msra.mxu0 0.0
    %523 = vmatprep.subr.mxu0 0.0
    %524 = vmatpush1.msra.mxu0 0.0
    %525 = vmatprep.subr.mxu0 0.0
    %526 = vmatpush1.msra.mxu0 0.0
    %527 = vmatprep.subr.mxu0 0.0
    %528 = vmatpush1.msra.mxu0 0.0
    %529 = vmatprep.subr.mxu0 0.0
    %530 = vmatpush1.msra.mxu0 0.0
    %531 = vmatprep.subr.mxu0 0.0
    %532 = vmatpush1.msra.mxu0 0.0
    %533 = vmatprep.subr.mxu0 0.0
    %534 = vmatpush1.msra.mxu0 0.0
    %535 = vmatprep.subr.mxu0 0.0
    %536 = vmatpush1.msra.mxu0 0.0
    %537 = vmatprep.subr.mxu0 0.0
    %538 = vmatpush1.msra.mxu0 0.0
    %539 = vmatprep.subr.mxu0 0.0
    %540 = vmatpush1.msra.mxu0 0.0
    %541 = vmatprep.subr.mxu0 0.0
    %542 = vmatpush1.msra.mxu0 0.0
    %543 = vmatprep.subr.mxu0 0.0
    %544 = vmatpush1.msra.mxu0 0.0
    %545 = vmatprep.subr.mxu0 0.0
    %546 = vmatpush1.msra.mxu0 0.0
    %547 = vmatprep.subr.mxu0 0.0
    %548 = vmatpush1.msra.mxu0 0.0
    %549 = vmatprep.subr.mxu0 0.0
    %550 = vmatpush1.msra.mxu0 0.0
    %551 = vmatprep.subr.mxu0 0.0
    %552 = vmatpush1.msra.mxu0 0.0
    %553 = vmatprep.subr.mxu0 0.0
    %554 = vmatpush1.msra.mxu0 0.0
    %555 = vmatprep.subr.mxu0 0.0
    %556 = vmatpush1.msra.mxu0 0.0
    %557 = vmatprep.subr.mxu0 0.0
    %558 = vmatpush1.msra.mxu0 0.0
    %559 = vmatprep.subr.mxu0 0.0
    %560 = vmatpush1.msra.mxu0 0.0
    %561 = vmatprep.subr.mxu0 0.0
    %562 = vmatpush1.msra.mxu0 0.0
    %563 = vmatprep.subr.mxu0 0.0
    %564 = vmatpush1.msra.mxu0 0.0
    %565 = vmatprep.subr.mxu0 0.0
    %566 = vmatpush1.msra.mxu0 0.0
    %567 = vmatprep.subr.mxu0 0.0
    %568 = vmatpush1.msra.mxu0 0.0
    %569 = vmatprep.subr.mxu0 0.0
    %570 = vmatpush1.msra.mxu0 0.0
    %571 = vmatprep.subr.mxu0 0.0
    %572 = vmatpush1.msra.mxu0 0.0
    %573 = vmatprep.mubr.f32.mxu0 0.0
    %574 = vmatmul.mubr.f32.gmra.mrb[0].mxu0 %v507
    %v575 = vpop.f32.mrb[0].mxu0
    %v576 = vadd.f32 0.0, %v575
    %v577 = vpop.f32.mrb[0].mxu0
    %578 = vdwg.mxu0
    %v579 = vadd.f32 %v576, 3.0
    %v580 = vmax.f32 %v579, 0.0
    %v581 = vmin.f32 %v580, 6.0
    %v582 = vmul.f32 %v576, %v581
    %v583 = vmul.f32 %v582, 0.16666667
    %v584 = vld [vmem:[%s8] sm:$0xff]
    %v585 = vld [vmem:[%s8 + $0x8] sm:$0xff]
    %v586 = vld [vmem:[%s8 + $0x10] sm:$0xff]
    %v587 = vld [vmem:[%s8 + $0x18] sm:$0xff]
    %s588 = scalar_lea.vmem %s2, 32
    %v589 = vld [vmem:[%s588] sm:$0xff]
    %v590 = vld [vmem:[%s588 + $0x8] sm:$0xff]
    %v591 = vld [vmem:[%s588 + $0x10] sm:$0xff]
    %v592 = vld [vmem:[%s588 + $0x18] sm:$0xff]
    %s593 = scalar_lea.vmem %s3, 1
    %v594 = vld [vmem:[%s593] sm:$0x1]
    %v596 = vlaneseq
    %v597 = vshrl.u32 %v596, 7
    %v598 = vsub.s32 0, %v597
    %v599 = vrot.slane %v594, %v598
    %601 = vmatprep.subr.mxu0 0.0
    %602 = vmatpush1.msra.mxu0 %v589
    %603 = vmatprep.subr.mxu0 0.0
    %604 = vmatpush1.msra.mxu0 %v590
    %605 = vmatprep.subr.mxu0 0.0
    %606 = vmatpush1.msra.mxu0 %v591
    %607 = vmatprep.subr.mxu0 0.0
    %608 = vmatpush1.msra.mxu0 %v592
    %609 = vmatprep.subr.mxu0 0.0
    %610 = vmatpush1.msra.mxu0 0.0
    %611 = vmatprep.subr.mxu0 0.0
    %612 = vmatpush1.msra.mxu0 0.0
    %613 = vmatprep.subr.mxu0 0.0
    %614 = vmatpush1.msra.mxu0 0.0
    %615 = vmatprep.subr.mxu0 0.0
    %616 = vmatpush1.msra.mxu0 0.0
    %617 = vmatprep.subr.mxu0 0.0
    %618 = vmatpush1.msra.mxu0 0.0
    %619 = vmatprep.subr.mxu0 0.0
    %620 = vmatpush1.msra.mxu0 0.0
    %621 = vmatprep.subr.mxu0 0.0
    %622 = vmatpush1.msra.mxu0 0.0
    %623 = vmatprep.subr.mxu0 0.0
    %624 = vmatpush1.msra.mxu0 0.0
    %625 = vmatprep.subr.mxu0 0.0
    %626 = vmatpush1.msra.mxu0 0.0
    %627 = vmatprep.subr.mxu0 0.0
    %628 = vmatpush1.msra.mxu0 0.0
    %629 = vmatprep.subr.mxu0 0.0
    %630 = vmatpush1.msra.mxu0 0.0
    %631 = vmatprep.subr.mxu0 0.0
    %632 = vmatpush1.msra.mxu0 0.0
    %633 = vmatprep.subr.mxu0 0.0
    %634 = vmatpush1.msra.mxu0 0.0
    %635 = vmatprep.subr.mxu0 0.0
    %636 = vmatpush1.msra.mxu0 0.0
    %637 = vmatprep.subr.mxu0 0.0
    %638 = vmatpush1.msra.mxu0 0.0
    %639 = vmatprep.subr.mxu0 0.0
    %640 = vmatpush1.msra.mxu0 0.0
    %641 = vmatprep.subr.mxu0 0.0
    %642 = vmatpush1.msra.mxu0 0.0
    %643 = vmatprep.subr.mxu0 0.0
    %644 = vmatpush1.msra.mxu0 0.0
    %645 = vmatprep.subr.mxu0 0.0
    %646 = vmatpush1.msra.mxu0 0.0
    %647 = vmatprep.subr.mxu0 0.0
    %648 = vmatpush1.msra.mxu0 0.0
    %649 = vmatprep.subr.mxu0 0.0
    %650 = vmatpush1.msra.mxu0 0.0
    %651 = vmatprep.subr.mxu0 0.0
    %652 = vmatpush1.msra.mxu0 0.0
    %653 = vmatprep.subr.mxu0 0.0
    %654 = vmatpush1.msra.mxu0 0.0
    %655 = vmatprep.subr.mxu0 0.0
    %656 = vmatpush1.msra.mxu0 0.0
    %657 = vmatprep.subr.mxu0 0.0
    %658 = vmatpush1.msra.mxu0 0.0
    %659 = vmatprep.subr.mxu0 0.0
    %660 = vmatpush1.msra.mxu0 0.0
    %661 = vmatprep.subr.mxu0 0.0
    %662 = vmatpush1.msra.mxu0 0.0
    %663 = vmatprep.subr.mxu0 0.0
    %664 = vmatpush1.msra.mxu0 0.0
    %665 = vmatprep.mubr.f32.mxu0 0.0
    %666 = vmatmul.mubr.f32.gmra.mrb[0].mxu0 %v139
    %v667 = vpop.f32.mrb[0].mxu0
    %v668 = vadd.f32 %v599, %v667
    %v669 = vpop.f32.mrb[0].mxu0
    %670 = vdwg.mxu0
    %s671 = scalar_lea.vmem %s4, 32
    %v672 = vld [vmem:[%s671] sm:$0xff]
    %v673 = vld [vmem:[%s671 + $0x8] sm:$0xff]
    %v674 = vld [vmem:[%s671 + $0x10] sm:$0xff]
    %v675 = vld [vmem:[%s671 + $0x18] sm:$0xff]
    %676 = vmatprep.subr.mxu0 0.0
    %677 = vmatpush1.msra.mxu0 %v672
    %678 = vmatprep.subr.mxu0 0.0
    %679 = vmatpush1.msra.mxu0 %v673
    %680 = vmatprep.subr.mxu0 0.0
    %681 = vmatpush1.msra.mxu0 %v674
    %682 = vmatprep.subr.mxu0 0.0
    %683 = vmatpush1.msra.mxu0 %v675
    %684 = vmatprep.subr.mxu0 0.0
    %685 = vmatpush1.msra.mxu0 0.0
    %686 = vmatprep.subr.mxu0 0.0
    %687 = vmatpush1.msra.mxu0 0.0
    %688 = vmatprep.subr.mxu0 0.0
    %689 = vmatpush1.msra.mxu0 0.0
    %690 = vmatprep.subr.mxu0 0.0
    %691 = vmatpush1.msra.mxu0 0.0
    %692 = vmatprep.subr.mxu0 0.0
    %693 = vmatpush1.msra.mxu0 0.0
    %694 = vmatprep.subr.mxu0 0.0
    %695 = vmatpush1.msra.mxu0 0.0
    %696 = vmatprep.subr.mxu0 0.0
    %697 = vmatpush1.msra.mxu0 0.0
    %698 = vmatprep.subr.mxu0 0.0
    %699 = vmatpush1.msra.mxu0 0.0
    %700 = vmatprep.subr.mxu0 0.0
    %701 = vmatpush1.msra.mxu0 0.0
    %702 = vmatprep.subr.mxu0 0.0
    %703 = vmatpush1.msra.mxu0 0.0
    %704 = vmatprep.subr.mxu0 0.0
    %705 = vmatpush1.msra.mxu0 0.0
    %706 = vmatprep.subr.mxu0 0.0
    %707 = vmatpush1.msra.mxu0 0.0
    %708 = vmatprep.subr.mxu0 0.0
    %709 = vmatpush1.msra.mxu0 0.0
    %710 = vmatprep.subr.mxu0 0.0
    %711 = vmatpush1.msra.mxu0 0.0
    %712 = vmatprep.subr.mxu0 0.0
    %713 = vmatpush1.msra.mxu0 0.0
    %714 = vmatprep.subr.mxu0 0.0
    %715 = vmatpush1.msra.mxu0 0.0
    %716 = vmatprep.subr.mxu0 0.0
    %717 = vmatpush1.msra.mxu0 0.0
    %718 = vmatprep.subr.mxu0 0.0
    %719 = vmatpush1.msra.mxu0 0.0
    %720 = vmatprep.subr.mxu0 0.0
    %721 = vmatpush1.msra.mxu0 0.0
    %722 = vmatprep.subr.mxu0 0.0
    %723 = vmatpush1.msra.mxu0 0.0
    %724 = vmatprep.subr.mxu0 0.0
    %725 = vmatpush1.msra.mxu0 0.0
    %726 = vmatprep.subr.mxu0 0.0
    %727 = vmatpush1.msra.mxu0 0.0
    %728 = vmatprep.subr.mxu0 0.0
    %729 = vmatpush1.msra.mxu0 0.0
    %730 = vmatprep.subr.mxu0 0.0
    %731 = vmatpush1.msra.mxu0 0.0
    %732 = vmatprep.subr.mxu0 0.0
    %733 = vmatpush1.msra.mxu0 0.0
    %734 = vmatprep.subr.mxu0 0.0
    %735 = vmatpush1.msra.mxu0 0.0
    %736 = vmatprep.subr.mxu0 0.0
    %737 = vmatpush1.msra.mxu0 0.0
    %738 = vmatprep.subr.mxu0 0.0
    %739 = vmatpush1.msra.mxu0 0.0
    %740 = vmatprep.mubr.f32.mxu0 0.0
    %741 = vmatmul.mubr.f32.gmra.mrb[0].mxu0 %v216
    %v742 = vpop.f32.mrb[0].mxu0
    %v743 = vadd.f32 0.0, %v742
    %v744 = vpop.f32.mrb[0].mxu0
    %745 = vmatprep.mubr.f32.mxu0 0.0
    %746 = vmatmul.mubr.f32.gmra.mrb[0].mxu0 %v219
    %v747 = vpop.f32.mrb[0].mxu0
    %v748 = vadd.f32 0.0, %v747
    %v749 = vpop.f32.mrb[0].mxu0
    %750 = vmatprep.mubr.f32.mxu0 0.0
    %751 = vmatmul.mubr.f32.gmra.mrb[0].mxu0 %v222
    %v752 = vpop.f32.mrb[0].mxu0
    %v753 = vadd.f32 0.0, %v752
    %v754 = vpop.f32.mrb[0].mxu0
    %755 = vmatprep.mubr.f32.mxu0 0.0
    %756 = vmatmul.mubr.f32.gmra.mrb[0].mxu0 %v225
    %v757 = vpop.f32.mrb[0].mxu0
    %v758 = vadd.f32 0.0, %v757
    %v759 = vpop.f32.mrb[0].mxu0
    %760 = vdwg.mxu0
    %s761 = scalar_lea.vmem %s5, 32
    %v762 = vld [vmem:[%s761] sm:$0xff]
    %v763 = vld [vmem:[%s761 + $0x8] sm:$0xff]
    %v764 = vld [vmem:[%s761 + $0x10] sm:$0xff]
    %v765 = vld [vmem:[%s761 + $0x18] sm:$0xff]
    %s766 = scalar_lea.vmem %s6, 1
    %v767 = vld [vmem:[%s766] sm:$0x1]
    %v769 = vlaneseq
    %v770 = vshrl.u32 %v769, 7
    %v771 = vsub.s32 0, %v770
    %v772 = vrot.slane %v767, %v771
    %774 = vmatprep.subr.mxu0 0.0
    %775 = vmatpush1.msra.mxu0 %v762
    %776 = vmatprep.subr.mxu0 0.0
    %777 = vmatpush1.msra.mxu0 %v763
    %778 = vmatprep.subr.mxu0 0.0
    %779 = vmatpush1.msra.mxu0 %v764
    %780 = vmatprep.subr.mxu0 0.0
    %781 = vmatpush1.msra.mxu0 %v765
    %782 = vmatprep.subr.mxu0 0.0
    %783 = vmatpush1.msra.mxu0 0.0
    %784 = vmatprep.subr.mxu0 0.0
    %785 = vmatpush1.msra.mxu0 0.0
    %786 = vmatprep.subr.mxu0 0.0
    %787 = vmatpush1.msra.mxu0 0.0
    %788 = vmatprep.subr.mxu0 0.0
    %789 = vmatpush1.msra.mxu0 0.0
    %790 = vmatprep.subr.mxu0 0.0
    %791 = vmatpush1.msra.mxu0 0.0
    %792 = vmatprep.subr.mxu0 0.0
    %793 = vmatpush1.msra.mxu0 0.0
    %794 = vmatprep.subr.mxu0 0.0
    %795 = vmatpush1.msra.mxu0 0.0
    %796 = vmatprep.subr.mxu0 0.0
    %797 = vmatpush1.msra.mxu0 0.0
    %798 = vmatprep.subr.mxu0 0.0
    %799 = vmatpush1.msra.mxu0 0.0
    %800 = vmatprep.subr.mxu0 0.0
    %801 = vmatpush1.msra.mxu0 0.0
    %802 = vmatprep.subr.mxu0 0.0
    %803 = vmatpush1.msra.mxu0 0.0
    %804 = vmatprep.subr.mxu0 0.0
    %805 = vmatpush1.msra.mxu0 0.0
    %806 = vmatprep.subr.mxu0 0.0
    %807 = vmatpush1.msra.mxu0 0.0
    %808 = vmatprep.subr.mxu0 0.0
    %809 = vmatpush1.msra.mxu0 0.0
    %810 = vmatprep.subr.mxu0 0.0
    %811 = vmatpush1.msra.mxu0 0.0
    %812 = vmatprep.subr.mxu0 0.0
    %813 = vmatpush1.msra.mxu0 0.0
    %814 = vmatprep.subr.mxu0 0.0
    %815 = vmatpush1.msra.mxu0 0.0
    %816 = vmatprep.subr.mxu0 0.0
    %817 = vmatpush1.msra.mxu0 0.0
    %818 = vmatprep.subr.mxu0 0.0
    %819 = vmatpush1.msra.mxu0 0.0
    %820 = vmatprep.subr.mxu0 0.0
    %821 = vmatpush1.msra.mxu0 0.0
    %822 = vmatprep.subr.mxu0 0.0
    %823 = vmatpush1.msra.mxu0 0.0
    %824 = vmatprep.subr.mxu0 0.0
    %825 = vmatpush1.msra.mxu0 0.0
    %826 = vmatprep.subr.mxu0 0.0
    %827 = vmatpush1.msra.mxu0 0.0
    %828 = vmatprep.subr.mxu0 0.0
    %829 = vmatpush1.msra.mxu0 0.0
    %830 = vmatprep.subr.mxu0 0.0
    %831 = vmatpush1.msra.mxu0 0.0
    %832 = vmatprep.subr.mxu0 0.0
    %833 = vmatpush1.msra.mxu0 0.0
    %834 = vmatprep.subr.mxu0 0.0
    %835 = vmatpush1.msra.mxu0 0.0
    %836 = vmatprep.subr.mxu0 0.0
    %837 = vmatpush1.msra.mxu0 0.0
    %838 = vmatprep.mubr.f32.mxu0 0.0
    %839 = vmatmul.mubr.f32.gmra.mrb[0].mxu0 %v216
    %v840 = vpop.f32.mrb[0].mxu0
    %v841 = vadd.f32 %v772, %v840
    %v842 = vpop.f32.mrb[0].mxu0
    %843 = vmatprep.mubr.f32.mxu0 0.0
    %844 = vmatmul.mubr.f32.gmra.mrb[0].mxu0 %v219
    %v845 = vpop.f32.mrb[0].mxu0
    %v846 = vadd.f32 %v772, %v845
    %v847 = vpop.f32.mrb[0].mxu0
    %848 = vmatprep.mubr.f32.mxu0 0.0
    %849 = vmatmul.mubr.f32.gmra.mrb[0].mxu0 %v222
    %v850 = vpop.f32.mrb[0].mxu0
    %v851 = vadd.f32 %v772, %v850
    %v852 = vpop.f32.mrb[0].mxu0
    %853 = vmatprep.mubr.f32.mxu0 0.0
    %854 = vmatmul.mubr.f32.gmra.mrb[0].mxu0 %v225
    %v855 = vpop.f32.mrb[0].mxu0
    %v856 = vadd.f32 %v772, %v855
    %v857 = vpop.f32.mrb[0].mxu0
    %858 = vdwg.mxu0
    %s859 = scalar_lea.vmem %s7, 8
    %v860 = vld [vmem:[%s859] sm:$0xff]
    %v862 = vsel %vm409, %v668, 0
    %v865 = vsel %vm409, %v743, 0
    %v868 = vsel %vm409, %v748, 0
    %v871 = vsel %vm409, %v753, 0
    %v874 = vsel %vm409, %v758, 0
    %876 = vmatprep.subr.mxu0 0.0
    %877 = vmatpush1.xpose.msra.mxu0 %v865
    %878 = vmatprep.subr.mxu0 0.0
    %879 = vmatpush1.xpose.msra.mxu0 %v868
    %880 = vmatprep.subr.mxu0 0.0
    %881 = vmatpush1.xpose.msra.mxu0 %v871
    %882 = vmatprep.subr.mxu0 0.0
    %883 = vmatpush1.xpose.msra.mxu0 %v874
    %884 = vmatprep.subr.mxu0 0.0
    %885 = vmatpush1.xpose.msra.mxu0 0.0
    %886 = vmatprep.subr.mxu0 0.0
    %887 = vmatpush1.xpose.msra.mxu0 0.0
    %888 = vmatprep.subr.mxu0 0.0
    %889 = vmatpush1.xpose.msra.mxu0 0.0
    %890 = vmatprep.subr.mxu0 0.0
    %891 = vmatpush1.xpose.msra.mxu0 0.0
    %892 = vmatprep.subr.mxu0 0.0
    %893 = vmatpush1.xpose.msra.mxu0 0.0
    %894 = vmatprep.subr.mxu0 0.0
    %895 = vmatpush1.xpose.msra.mxu0 0.0
    %896 = vmatprep.subr.mxu0 0.0
    %897 = vmatpush1.xpose.msra.mxu0 0.0
    %898 = vmatprep.subr.mxu0 0.0
    %899 = vmatpush1.xpose.msra.mxu0 0.0
    %900 = vmatprep.subr.mxu0 0.0
    %901 = vmatpush1.xpose.msra.mxu0 0.0
    %902 = vmatprep.subr.mxu0 0.0
    %903 = vmatpush1.xpose.msra.mxu0 0.0
    %904 = vmatprep.subr.mxu0 0.0
    %905 = vmatpush1.xpose.msra.mxu0 0.0
    %906 = vmatprep.subr.mxu0 0.0
    %907 = vmatpush1.xpose.msra.mxu0 0.0
    %908 = vmatprep.subr.mxu0 0.0
    %909 = vmatpush1.xpose.msra.mxu0 0.0
    %910 = vmatprep.subr.mxu0 0.0
    %911 = vmatpush1.xpose.msra.mxu0 0.0
    %912 = vmatprep.subr.mxu0 0.0
    %913 = vmatpush1.xpose.msra.mxu0 0.0
    %914 = vmatprep.subr.mxu0 0.0
    %915 = vmatpush1.xpose.msra.mxu0 0.0
    %916 = vmatprep.subr.mxu0 0.0
    %917 = vmatpush1.xpose.msra.mxu0 0.0
    %918 = vmatprep.subr.mxu0 0.0
    %919 = vmatpush1.xpose.msra.mxu0 0.0
    %920 = vmatprep.subr.mxu0 0.0
    %921 = vmatpush1.xpose.msra.mxu0 0.0
    %922 = vmatprep.subr.mxu0 0.0
    %923 = vmatpush1.xpose.msra.mxu0 0.0
    %924 = vmatprep.subr.mxu0 0.0
    %925 = vmatpush1.xpose.msra.mxu0 0.0
    %926 = vmatprep.subr.mxu0 0.0
    %927 = vmatpush1.xpose.msra.mxu0 0.0
    %928 = vmatprep.subr.mxu0 0.0
    %929 = vmatpush1.xpose.msra.mxu0 0.0
    %930 = vmatprep.subr.mxu0 0.0
    %931 = vmatpush1.xpose.msra.mxu0 0.0
    %932 = vmatprep.subr.mxu0 0.0
    %933 = vmatpush1.xpose.msra.mxu0 0.0
    %934 = vmatprep.subr.mxu0 0.0
    %935 = vmatpush1.xpose.msra.mxu0 0.0
    %936 = vmatprep.subr.mxu0 0.0
    %937 = vmatpush1.xpose.msra.mxu0 0.0
    %938 = vmatprep.subr.mxu0 0.0
    %939 = vmatpush1.xpose.msra.mxu0 0.0
    %940 = vmatprep.mubr.f32.mxu0 0.0
    %941 = vmatmul.mubr.f32.gmra.mrb[0].mxu0 %v862
    %v942 = vpop.f32.mrb[0].mxu0
    %v943 = vadd.f32 %v860, %v942
    %v944 = vpop.f32.mrb[0].mxu0
    %945 = vdwg.mxu0
    %v946 = vsel %vm53, %v943, -inf
    %947 = vmax.xlane.f32.xlu0 %v946
    %v948 = vpop.xlane.xlu0 %947
    %v949 = vsub.f32 %v943, %v948
    %v950 = vmul.f32 %v949, 1.442695
    %v951 = vpow.pop %v950
    %v952 = vsel %vm53, %v951, 0.0
    %953 = vadd.xlane.f32.xlu0 %v952
    %v954 = vpop.xlane.xlu0 %953
    %v955 = vrcp.pop %v954
    %v956 = vmul.f32 %v951, %v955
    %v958 = vsel %vm53, %v956, 0
    %960 = vmatprep.subr.mxu0 0.0
    %961 = vmatpush1.msra.mxu0 %v841
    %962 = vmatprep.subr.mxu0 0.0
    %963 = vmatpush1.msra.mxu0 %v846
    %964 = vmatprep.subr.mxu0 0.0
    %965 = vmatpush1.msra.mxu0 %v851
    %966 = vmatprep.subr.mxu0 0.0
    %967 = vmatpush1.msra.mxu0 %v856
    %968 = vmatprep.subr.mxu0 0.0
    %969 = vmatpush1.msra.mxu0 0.0
    %970 = vmatprep.subr.mxu0 0.0
    %971 = vmatpush1.msra.mxu0 0.0
    %972 = vmatprep.subr.mxu0 0.0
    %973 = vmatpush1.msra.mxu0 0.0
    %974 = vmatprep.subr.mxu0 0.0
    %975 = vmatpush1.msra.mxu0 0.0
    %976 = vmatprep.subr.mxu0 0.0
    %977 = vmatpush1.msra.mxu0 0.0
    %978 = vmatprep.subr.mxu0 0.0
    %979 = vmatpush1.msra.mxu0 0.0
    %980 = vmatprep.subr.mxu0 0.0
    %981 = vmatpush1.msra.mxu0 0.0
    %982 = vmatprep.subr.mxu0 0.0
    %983 = vmatpush1.msra.mxu0 0.0
    %984 = vmatprep.subr.mxu0 0.0
    %985 = vmatpush1.msra.mxu0 0.0
    %986 = vmatprep.subr.mxu0 0.0
    %987 = vmatpush1.msra.mxu0 0.0
    %988 = vmatprep.subr.mxu0 0.0
    %989 = vmatpush1.msra.mxu0 0.0
    %990 = vmatprep.subr.mxu0 0.0
    %991 = vmatpush1.msra.mxu0 0.0
    %992 = vmatprep.subr.mxu0 0.0
    %993 = vmatpush1.msra.mxu0 0.0
    %994 = vmatprep.subr.mxu0 0.0
    %995 = vmatpush1.msra.mxu0 0.0
    %996 = vmatprep.subr.mxu0 0.0
    %997 = vmatpush1.msra.mxu0 0.0
    %998 = vmatprep.subr.mxu0 0.0
    %999 = vmatpush1.msra.mxu0 0.0
    %1000 = vmatprep.subr.mxu0 0.0
    %1001 = vmatpush1.msra.mxu0 0.0
    %1002 = vmatprep.subr.mxu0 0.0
    %1003 = vmatpush1.msra.mxu0 0.0
    %1004 = vmatprep.subr.mxu0 0.0
    %1005 = vmatpush1.msra.mxu0 0.0
    %1006 = vmatprep.subr.mxu0 0.0
    %1007 = vmatpush1.msra.mxu0 0.0
    %1008 = vmatprep.subr.mxu0 0.0
    %1009 = vmatpush1.msra.mxu0 0.0
    %1010 = vmatprep.subr.mxu0 0.0
    %1011 = vmatpush1.msra.mxu0 0.0
    %1012 = vmatprep.subr.mxu0 0.0
    %1013 = vmatpush1.msra.mxu0 0.0
    %1014 = vmatprep.subr.mxu0 0.0
    %1015 = vmatpush1.msra.mxu0 0.0
    %1016 = vmatprep.subr.mxu0 0.0
    %1017 = vmatpush1.msra.mxu0 0.0
    %1018 = vmatprep.subr.mxu0 0.0
    %1019 = vmatpush1.msra.mxu0 0.0
    %1020 = vmatprep.subr.mxu0 0.0
    %1021 = vmatpush1.msra.mxu0 0.0
    %1022 = vmatprep.subr.mxu0 0.0
    %1023 = vmatpush1.msra.mxu0 0.0
    %1024 = vmatprep.mubr.f32.mxu0 0.0
    %1025 = vmatmul.mubr.f32.gmra.mrb[0].mxu0 %v958
    %v1026 = vpop.f32.mrb[0].mxu0
    %v1027 = vadd.f32 0.0, %v1026
    %v1028 = vpop.f32.mrb[0].mxu0
    %1029 = vdwg.mxu0
    %v1030 = vadd.f32 %v1027, 3.0
    %v1031 = vmax.f32 %v1030, 0.0
    %v1032 = vmin.f32 %v1031, 6.0
    %v1033 = vmul.f32 %v1027, %v1032
    %v1034 = vmul.f32 %v1033, 0.16666667
    %s1035 = scalar_lea.vmem %s8, 32
    %v1036 = vld [vmem:[%s1035] sm:$0xff]
    %v1037 = vld [vmem:[%s1035 + $0x8] sm:$0xff]
    %v1038 = vld [vmem:[%s1035 + $0x10] sm:$0xff]
    %v1039 = vld [vmem:[%s1035 + $0x18] sm:$0xff]
    %v1041 = vsel %vm53, %v1034, 0
    %1043 = vmatprep.subr.mxu0 0.0
    %1044 = vmatpush1.msra.mxu0 %v1036
    %1045 = vmatprep.subr.mxu0 0.0
    %1046 = vmatpush1.msra.mxu0 %v1037
    %1047 = vmatprep.subr.mxu0 0.0
    %1048 = vmatpush1.msra.mxu0 %v1038
    %1049 = vmatprep.subr.mxu0 0.0
    %1050 = vmatpush1.msra.mxu0 %v1039
    %1051 = vmatprep.subr.mxu0 0.0
    %1052 = vmatpush1.msra.mxu0 0.0
    %1053 = vmatprep.subr.mxu0 0.0
    %1054 = vmatpush1.msra.mxu0 0.0
    %1055 = vmatprep.subr.mxu0 0.0
    %1056 = vmatpush1.msra.mxu0 0.0
    %1057 = vmatprep.subr.mxu0 0.0
    %1058 = vmatpush1.msra.mxu0 0.0
    %1059 = vmatprep.subr.mxu0 0.0
    %1060 = vmatpush1.msra.mxu0 0.0
    %1061 = vmatprep.subr.mxu0 0.0
    %1062 = vmatpush1.msra.mxu0 0.0
    %1063 = vmatprep.subr.mxu0 0.0
    %1064 = vmatpush1.msra.mxu0 0.0
    %1065 = vmatprep.subr.mxu0 0.0
    %1066 = vmatpush1.msra.mxu0 0.0
    %1067 = vmatprep.subr.mxu0 0.0
    %1068 = vmatpush1.msra.mxu0 0.0
    %1069 = vmatprep.subr.mxu0 0.0
    %1070 = vmatpush1.msra.mxu0 0.0
    %1071 = vmatprep.subr.mxu0 0.0
    %1072 = vmatpush1.msra.mxu0 0.0
    %1073 = vmatprep.subr.mxu0 0.0
    %1074 = vmatpush1.msra.mxu0 0.0
    %1075 = vmatprep.subr.mxu0 0.0
    %1076 = vmatpush1.msra.mxu0 0.0
    %1077 = vmatprep.subr.mxu0 0.0
    %1078 = vmatpush1.msra.mxu0 0.0
    %1079 = vmatprep.subr.mxu0 0.0
    %1080 = vmatpush1.msra.mxu0 0.0
    %1081 = vmatprep.subr.mxu0 0.0
    %1082 = vmatpush1.msra.mxu0 0.0
    %1083 = vmatprep.subr.mxu0 0.0
    %1084 = vmatpush1.msra.mxu0 0.0
    %1085 = vmatprep.subr.mxu0 0.0
    %1086 = vmatpush1.msra.mxu0 0.0
    %1087 = vmatprep.subr.mxu0 0.0
    %1088 = vmatpush1.msra.mxu0 0.0
    %1089 = vmatprep.subr.mxu0 0.0
    %1090 = vmatpush1.msra.mxu0 0.0
    %1091 = vmatprep.subr.mxu0 0.0
    %1092 = vmatpush1.msra.mxu0 0.0
    %1093 = vmatprep.subr.mxu0 0.0
    %1094 = vmatpush1.msra.mxu0 0.0
    %1095 = vmatprep.subr.mxu0 0.0
    %1096 = vmatpush1.msra.mxu0 0.0
    %1097 = vmatprep.subr.mxu0 0.0
    %1098 = vmatpush1.msra.mxu0 0.0
    %1099 = vmatprep.subr.mxu0 0.0
    %1100 = vmatpush1.msra.mxu0 0.0
    %1101 = vmatprep.subr.mxu0 0.0
    %1102 = vmatpush1.msra.mxu0 0.0
    %1103 = vmatprep.subr.mxu0 0.0
    %1104 = vmatpush1.msra.mxu0 0.0
    %1105 = vmatprep.subr.mxu0 0.0
    %1106 = vmatpush1.msra.mxu0 0.0
    %1107 = vmatprep.mubr.f32.mxu0 0.0
    %1108 = vmatmul.mubr.f32.gmra.mrb[0].mxu0 %v1041
    %v1109 = vpop.f32.mrb[0].mxu0
    %v1110 = vadd.f32 0.0, %v1109
    %v1111 = vpop.f32.mrb[0].mxu0
    %1112 = vdwg.mxu0
    %v1114 = vsel %vm53, %v583, 0
    %1116 = vmatprep.subr.mxu0 0.0
    %1117 = vmatpush1.msra.mxu0 %v584
    %1118 = vmatprep.subr.mxu0 0.0
    %1119 = vmatpush1.msra.mxu0 %v585
    %1120 = vmatprep.subr.mxu0 0.0
    %1121 = vmatpush1.msra.mxu0 %v586
    %1122 = vmatprep.subr.mxu0 0.0
    %1123 = vmatpush1.msra.mxu0 %v587
    %1124 = vmatprep.subr.mxu0 0.0
    %1125 = vmatpush1.msra.mxu0 0.0
    %1126 = vmatprep.subr.mxu0 0.0
    %1127 = vmatpush1.msra.mxu0 0.0
    %1128 = vmatprep.subr.mxu0 0.0
    %1129 = vmatpush1.msra.mxu0 0.0
    %1130 = vmatprep.subr.mxu0 0.0
    %1131 = vmatpush1.msra.mxu0 0.0
    %1132 = vmatprep.subr.mxu0 0.0
    %1133 = vmatpush1.msra.mxu0 0.0
    %1134 = vmatprep.subr.mxu0 0.0
    %1135 = vmatpush1.msra.mxu0 0.0
    %1136 = vmatprep.subr.mxu0 0.0
    %1137 = vmatpush1.msra.mxu0 0.0
    %1138 = vmatprep.subr.mxu0 0.0
    %1139 = vmatpush1.msra.mxu0 0.0
    %1140 = vmatprep.subr.mxu0 0.0
    %1141 = vmatpush1.msra.mxu0 0.0
    %1142 = vmatprep.subr.mxu0 0.0
    %1143 = vmatpush1.msra.mxu0 0.0
    %1144 = vmatprep.subr.mxu0 0.0
    %1145 = vmatpush1.msra.mxu0 0.0
    %1146 = vmatprep.subr.mxu0 0.0
    %1147 = vmatpush1.msra.mxu0 0.0
    %1148 = vmatprep.subr.mxu0 0.0
    %1149 = vmatpush1.msra.mxu0 0.0
    %1150 = vmatprep.subr.mxu0 0.0
    %1151 = vmatpush1.msra.mxu0 0.0
    %1152 = vmatprep.subr.mxu0 0.0
    %1153 = vmatpush1.msra.mxu0 0.0
    %1154 = vmatprep.subr.mxu0 0.0
    %1155 = vmatpush1.msra.mxu0 0.0
    %1156 = vmatprep.subr.mxu0 0.0
    %1157 = vmatpush1.msra.mxu0 0.0
    %1158 = vmatprep.subr.mxu0 0.0
    %1159 = vmatpush1.msra.mxu0 0.0
    %1160 = vmatprep.subr.mxu0 0.0
    %1161 = vmatpush1.msra.mxu0 0.0
    %1162 = vmatprep.subr.mxu0 0.0
    %1163 = vmatpush1.msra.mxu0 0.0
    %1164 = vmatprep.subr.mxu0 0.0
    %1165 = vmatpush1.msra.mxu0 0.0
    %1166 = vmatprep.subr.mxu0 0.0
    %1167 = vmatpush1.msra.mxu0 0.0
    %1168 = vmatprep.subr.mxu0 0.0
    %1169 = vmatpush1.msra.mxu0 0.0
    %1170 = vmatprep.subr.mxu0 0.0
    %1171 = vmatpush1.msra.mxu0 0.0
    %1172 = vmatprep.subr.mxu0 0.0
    %1173 = vmatpush1.msra.mxu0 0.0
    %1174 = vmatprep.subr.mxu0 0.0
    %1175 = vmatpush1.msra.mxu0 0.0
    %1176 = vmatprep.subr.mxu0 0.0
    %1177 = vmatpush1.msra.mxu0 0.0
    %1178 = vmatprep.subr.mxu0 0.0
    %1179 = vmatpush1.msra.mxu0 0.0
    %1180 = vmatprep.mubr.f32.mxu0 0.0
    %1181 = vmatmul.mubr.f32.gmra.mrb[0].mxu0 %v1114
    %v1182 = vpop.f32.mrb[0].mxu0
    %v1183 = vadd.f32 %v1110, %v1182
    %v1184 = vpop.f32.mrb[0].mxu0
    %1185 = vdwg.mxu0
    %v1186 = vld [vmem:[%s9] sm:$0x1]
    %v1188 = vlaneseq
    %v1189 = vshrl.u32 %v1188, 7
    %v1190 = vsub.s32 0, %v1189
    %v1191 = vrot.slane %v1186, %v1190
    %v1193 = vadd.f32 %v1183, %v1191
    %vm1194 = vcmask 523264
    %1195 = vst.msk [vmem:[#allocation5] sm:$0xff] %vm1194, %v1193
    // Predicated region
    $region46: #{tpu_custom_call.1} parent=1 // pred_check
      _
    $region47: #{tpu_custom_call.1} parent=1 // pred_check_branch
      %1197 = sbr.rel (0) target = $region49
    $region48: #{tpu_custom_call.1} parent=1 // pred_region
      %s1199 = ssub.s32 128, 128
      %1200 = vsyncadd [#allocation4], %s1199
      %s1202 = sshll.u32 [#allocation5], 4
      %s1203 = int_to_ptr.vmem [resolvable:$true] %s1202
      %1205 = dma.vmem_to_hbm [thread:$0]  %s1203, 128, %s10, [#allocation4]
    $region49: #{tpu_custom_call.1} parent=1 // pred_fallthru
      _
    // Predicated region
    $region50: #{tpu_custom_call.1} parent=1 // pred_check
      _
    $region51: #{tpu_custom_call.1} parent=1 // pred_check_branch
      %1207 = sbr.rel (0) target = $region53
    $region52: #{tpu_custom_call.1} parent=1 // pred_region
      %1208 = dma.done [#allocation4], 128
    $region53: #{tpu_custom_call.1} parent=1 // pred_fallthru
      _
    %1209 = vsyncpa [#allocation3], 1
    %1210 = vsyncpa [#allocation4], 1

</llo_original>
